<compile_context>
chip_gen: v6e
topology: v6e:2x2x1
jax: 0.10.0
libtpu: 0.0.40
codegen_flags: <defaults>
</compile_context>

<pallas_src>
import numpy as np
import jax
import jax.numpy as jnp
from jax import lax
from jax.experimental import pallas as pl
from jax.experimental.pallas import tpu as pltpu


def _bn_fold(gamma, beta, mean, var, eps=1e-5):
    scale = gamma / jnp.sqrt(var + eps)
    bias = beta - mean * scale
    return scale.reshape(1, -1), bias.reshape(1, -1)


def init_params(key, planes_1, planes_2, cin=3):
    ks = jax.random.split(key, 8)

    def bn(k, c):
        k1, k2, k3, k4 = jax.random.split(k, 4)
        gamma = 1.0 + 0.1 * jax.random.normal(k1, (c,), jnp.float32)
        beta = 0.1 * jax.random.normal(k2, (c,), jnp.float32)
        mean = 0.1 * jax.random.normal(k3, (c,), jnp.float32)
        var = 0.5 + jnp.abs(jax.random.normal(k4, (c,), jnp.float32))
        return _bn_fold(gamma, beta, mean, var)

    # 1x1 conv weights stored as (Cin, Cout); depthwise 3x3 as (3, 3, C).
    w1 = 0.4 * jax.random.normal(ks[0], (cin, planes_1), jnp.float32)
    s1, b1 = bn(ks[1], planes_1)
    w2 = 0.4 * jax.random.normal(ks[2], (3, 3, planes_1), jnp.float32)
    s2, b2 = bn(ks[3], planes_1)
    w3 = 0.4 * jax.random.normal(ks[4], (planes_1, planes_2), jnp.float32)
    s3, b3 = bn(ks[5], planes_2)
    w4 = 0.4 * jax.random.normal(ks[6], (3, 3, planes_2), jnp.float32)
    s4, b4 = bn(ks[7], planes_2)
    return (w1, s1, b1, w2, s2, b2, w3, s3, b3, w4, s4, b4)


def _make_kernel(H, W, P1, P2, sA, sB, H2, W2, H4, W4):
    """Build the per-image kernel with all sizes / strides static."""
    WL1 = W * P1     # packed lane width of stage-1/2 activations
    WL2 = W2 * P2    # packed lane width of stage-3/4 activations
    f32 = jnp.float32

    def row_slice(ref, start, size, step):
        if step == 1:
            return ref[pl.ds(start, size), :]
        return ref[pl.ds(start, size, stride=step), :]

    def tap_sum(rows, wt_ref, dx):
        # rows[dy] : (R, W*C) ; wt_ref row 3*dy+dx holds w[dy,dx,:] tiled W times.
        acc = rows[0] * wt_ref[dx:dx + 1, :]
        acc = acc + rows[1] * wt_ref[3 + dx:3 + dx + 1, :]
        acc = acc + rows[2] * wt_ref[6 + dx:6 + dx + 1, :]
        return acc

    def kernel(x_ref, w1b_ref, s1_ref, b1_ref,
               w2t_ref, s2_ref, b2_ref,
               m3_ref, s3_ref, b3_ref,
               w4t_ref, sel4_ref, s4_ref, b4_ref,
               o_ref, scr1, scr2):
        # ---- stage 1: 1x1 conv as one lane-dense matmul + folded BN + ReLU ----
        x = x_ref[0]                                              # (H, W*Cin)
        a1 = jnp.dot(x, w1b_ref[...], preferred_element_type=f32)  # (H, W*P1)
        a1 = jnp.maximum(a1 * s1_ref[...] + b1_ref[...], 0.0)

        # Row-padded scratch (zero rows implement the 3x3 'pad=1' in H).
        scr1[0:1, :] = jnp.zeros((1, WL1), f32)
        scr1[1:H + 1, :] = a1
        scr1[H + 1:H + 2, :] = jnp.zeros((1, WL1), f32)

        # Edge masks for the wrap-around of the W-shift rolls (pad=1 in W).
        lane1 = lax.broadcasted_iota(jnp.int32, (1, WL1), 1)
        left_ok1 = lane1 >= P1
        right_ok1 = lane1 < (W - 1) * P1

        # ---- stage 2: depthwise 3x3, stride sA (dense in W) ----
        # Tap dy needs padded rows sA*ho + dy  (ho = 0..H2-1)  -> strided read.
        t_rows = tuple(row_slice(scr1, dy, H2, sA) for dy in range(3))
        c0 = tap_sum(t_rows, w2t_ref, 0)      # needs col w-1 -> roll right by P1
        c1 = tap_sum(t_rows, w2t_ref, 1)
        c2 = tap_sum(t_rows, w2t_ref, 2)      # needs col w+1 -> roll left  by P1
        c0 = jnp.where(left_ok1, pltpu.roll(c0, P1, axis=1), 0.0)
        c2 = jnp.where(right_ok1, pltpu.roll(c2, (WL1 - P1) % WL1, axis=1), 0.0)
        pre2 = c0 + c1 + c2                                       # (H2, W*P1)
        h2 = jnp.maximum(pre2 * s2_ref[...] + b2_ref[...], 0.0)

        # ---- stage 3: fused (W-downsample x 1x1 conv) matmul + BN + ReLU ----
        a3 = jnp.dot(h2, m3_ref[...], preferred_element_type=f32)  # (H2, W2*P2)
        a3 = jnp.maximum(a3 * s3_ref[...] + b3_ref[...], 0.0)

        scr2[0:1, :] = jnp.zeros((1, WL2), f32)
        scr2[1:H2 + 1, :] = a3
        scr2[H2 + 1:H2 + 2, :] = jnp.zeros((1, WL2), f32)

        lane2 = lax.broadcasted_iota(jnp.int32, (1, WL2), 1)
        left_ok2 = lane2 >= P2
        right_ok2 = lane2 < (W2 - 1) * P2

        # ---- stage 4: depthwise 3x3, stride sB + BN + ReLU ----
        u_rows = tuple(row_slice(scr2, dy, H4, sB) for dy in range(3))
        d0 = tap_sum(u_rows, w4t_ref, 0)
        d1 = tap_sum(u_rows, w4t_ref, 1)
        d2 = tap_sum(u_rows, w4t_ref, 2)
        d0 = jnp.where(left_ok2, pltpu.roll(d0, P2, axis=1), 0.0)
        d2 = jnp.where(right_ok2, pltpu.roll(d2, (WL2 - P2) % WL2, axis=1), 0.0)
        pre4 = d0 + d1 + d2                                       # (H4, W2*P2)

        # W-downsample via a single host-built selection matmul, then BN+ReLU,
        # stored once as a single slab.
        out = jnp.dot(pre4, sel4_ref[...], preferred_element_type=f32)  # (H4, W4*P2)
        out = jnp.maximum(out * s4_ref[...] + b4_ref[...], 0.0)
        o_ref[0] = out.astype(o_ref.dtype)

    return kernel


def single_motion_encoder(x_nchw, params, stride=(2, 2)):
    (w1, s1, b1, w2, s2, b2, w3, s3, b3, w4, s4, b4) = params
    x = jnp.transpose(x_nchw, (0, 2, 3, 1)).astype(jnp.float32)   # NCHW -> NHWC
    N, H, W, Cin = x.shape
    P1, P2 = w1.shape[1], w3.shape[1]
    sA, sB = int(stride[0]), int(stride[1])
    H2, W2 = (H - 1) // sA + 1, (W - 1) // sA + 1
    H4, W4 = (H2 - 1) // sB + 1, (W2 - 1) // sB + 1
    WL1, WL2, WL4 = W * P1, W2 * P2, W4 * P2
    f32 = jnp.float32

    # ---- host-side (XLA) preprocessing of inputs / weights (done once) ----
    x2d = x.reshape(N, H, W * Cin)                                # packed rows
    w1_blk = jnp.kron(jnp.eye(W, dtype=f32), w1)                  # (W*Cin, W*P1)
    s1_t, b1_t = jnp.tile(s1, (1, W)), jnp.tile(b1, (1, W))
    w2_t = jnp.tile(w2.reshape(9, P1), (1, W))                    # (9, W*P1)
    s2_t, b2_t = jnp.tile(s2, (1, W)), jnp.tile(b2, (1, W))
    sel2 = (jnp.arange(W)[:, None] == sA * jnp.arange(W2)[None, :]).astype(f32)
    m3 = jnp.kron(sel2, w3)                                       # (W*P1, W2*P2)
    s3_t, b3_t = jnp.tile(s3, (1, W2)), jnp.tile(b3, (1, W2))
    w4_t = jnp.tile(w4.reshape(9, P2), (1, W2))                   # (9, W2*P2)
    sel4 = jnp.kron(
        (jnp.arange(W2)[:, None] == sB * jnp.arange(W4)[None, :]).astype(f32),
        jnp.eye(P2, dtype=f32))                                   # (W2*P2, W4*P2)
    s4_t, b4_t = jnp.tile(s4, (1, W4)), jnp.tile(b4, (1, W4))

    kernel = _make_kernel(H, W, P1, P2, sA, sB, H2, W2, H4, W4)

    def full(a):
        return pl.BlockSpec(a.shape, lambda b: (0, 0))            # all weights 2-D

    grid_spec = pltpu.PrefetchScalarGridSpec(
        num_scalar_prefetch=0,
        grid=(N,),                                                # one image / step
        in_specs=[
            pl.BlockSpec((1, H, W * Cin), lambda b: (b, 0, 0)),
            full(w1_blk), full(s1_t), full(b1_t),
            full(w2_t), full(s2_t), full(b2_t),
            full(m3), full(s3_t), full(b3_t),
            full(w4_t), full(sel4), full(s4_t), full(b4_t),
        ],
        out_specs=pl.BlockSpec((1, H4, WL4), lambda b: (b, 0, 0)),
        scratch_shapes=[
            pltpu.VMEM((H + 2, WL1), f32),    # stage-1 activations (row-padded)
            pltpu.VMEM((H2 + 2, WL2), f32),   # stage-3 activations (row-padded)
        ],
    )
    out = pl.pallas_call(
        kernel,
        out_shape=jax.ShapeDtypeStruct((N, H4, WL4), f32),
        grid_spec=grid_spec,
        compiler_params=pltpu.CompilerParams(
            dimension_semantics=("parallel",)),   # batch images are independent
    )(x2d, w1_blk, s1_t, b1_t, w2_t, s2_t, b2_t,
      m3, s3_t, b3_t, w4_t, sel4, s4_t, b4_t)
    out = out.reshape(N, H4, W4, P2)
    return jnp.transpose(out, (0, 3, 1, 2))                        # NHWC -> NCHW


def ref_forward_nchw(x_nchw, params, stride=(2, 2)):
    """Pure-JAX reference (same eval-mode BN folding)."""
    (w1, s1, b1, w2, s2, b2, w3, s3, b3, w4, s4, b4) = params
    x = jnp.transpose(x_nchw, (0, 2, 3, 1)).astype(jnp.float32)

    def bnrelu(y, s, b):
        return jnp.maximum(y * s.reshape(1, 1, 1, -1) + b.reshape(1, 1, 1, -1), 0.0)

    y = bnrelu(jnp.einsum('nhwc,co->nhwo', x, w1), s1, b1)
    y = lax.conv_general_dilated(y, w2[:, :, None, :], (stride[0], stride[0]),
                                 ((1, 1), (1, 1)),
                                 dimension_numbers=('NHWC', 'HWIO', 'NHWC'),
                                 feature_group_count=w2.shape[-1])
    y = bnrelu(y, s2, b2)
    y = bnrelu(jnp.einsum('nhwc,co->nhwo', y, w3), s3, b3)
    y = lax.conv_general_dilated(y, w4[:, :, None, :], (stride[1], stride[1]),
                                 ((1, 1), (1, 1)),
                                 dimension_numbers=('NHWC', 'HWIO', 'NHWC'),
                                 feature_group_count=w4.shape[-1])
    y = bnrelu(y, s4, b4)
    return jnp.transpose(y, (0, 3, 1, 2))


if __name__ == "__main__":
    key = jax.random.PRNGKey(0)
    kx, kp = jax.random.split(key)
    planes_1, planes_2 = 8, 16
    x = jax.random.normal(kx, (2, 3, 16, 16), jnp.float32)   # NCHW, like PyTorch
    params = init_params(kp, planes_1, planes_2, cin=3)

    out = single_motion_encoder(x, params, stride=(2, 2))
    out = jax.block_until_ready(out)

    assert out.shape == (2, planes_2, 4, 4), out.shape
    ref = ref_forward_nchw(x, params, stride=(2, 2))
    np.testing.assert_allclose(np.asarray(out), np.asarray(ref), rtol=1e-3, atol=1e-3)
    print("KERNEL_OK")
</pallas_src>

<mosaic_0001>
module attributes {stable_mosaic.version = 11 : i64} {
  func.func @kernel(%arg0: i32, %arg1: memref<1x16x48xf32, #tpu.memory_space<vmem>>, %arg2: memref<48x128xf32, #tpu.memory_space<vmem>>, %arg3: memref<1x128xf32, #tpu.memory_space<vmem>>, %arg4: memref<1x128xf32, #tpu.memory_space<vmem>>, %arg5: memref<9x128xf32, #tpu.memory_space<vmem>>, %arg6: memref<1x128xf32, #tpu.memory_space<vmem>>, %arg7: memref<1x128xf32, #tpu.memory_space<vmem>>, %arg8: memref<128x128xf32, #tpu.memory_space<vmem>>, %arg9: memref<1x128xf32, #tpu.memory_space<vmem>>, %arg10: memref<1x128xf32, #tpu.memory_space<vmem>>, %arg11: memref<9x128xf32, #tpu.memory_space<vmem>>, %arg12: memref<128x64xf32, #tpu.memory_space<vmem>>, %arg13: memref<1x64xf32, #tpu.memory_space<vmem>>, %arg14: memref<1x64xf32, #tpu.memory_space<vmem>>, %arg15: memref<1x4x64xf32, #tpu.memory_space<vmem>>, %arg16: memref<18x128xf32, #tpu.memory_space<vmem>>, %arg17: memref<10x128xf32, #tpu.memory_space<vmem>>) attributes {dimension_semantics = [#tpu.dimension_semantics<parallel>], iteration_bounds = array<i64: 2>, scalar_prefetch = 0 : i64, scratch_operands = 2 : i64, tpu.core_type = #tpu.core_type<tc>, window_params = [{transform_indices = @transform_0, window_bounds = array<i64: 1, 16, 48>}, {pipeline_mode = #tpu.pipeline_mode<synchronous>, transform_indices = @transform_1, window_bounds = array<i64: 48, 128>}, {pipeline_mode = #tpu.pipeline_mode<synchronous>, transform_indices = @transform_2, window_bounds = array<i64: 1, 128>}, {pipeline_mode = #tpu.pipeline_mode<synchronous>, transform_indices = @transform_3, window_bounds = array<i64: 1, 128>}, {pipeline_mode = #tpu.pipeline_mode<synchronous>, transform_indices = @transform_4, window_bounds = array<i64: 9, 128>}, {pipeline_mode = #tpu.pipeline_mode<synchronous>, transform_indices = @transform_5, window_bounds = array<i64: 1, 128>}, {pipeline_mode = #tpu.pipeline_mode<synchronous>, transform_indices = @transform_6, window_bounds = array<i64: 1, 128>}, {pipeline_mode = #tpu.pipeline_mode<synchronous>, transform_indices = @transform_7, window_bounds = array<i64: 128, 128>}, {pipeline_mode = #tpu.pipeline_mode<synchronous>, transform_indices = @transform_8, window_bounds = array<i64: 1, 128>}, {pipeline_mode = #tpu.pipeline_mode<synchronous>, transform_indices = @transform_9, window_bounds = array<i64: 1, 128>}, {pipeline_mode = #tpu.pipeline_mode<synchronous>, transform_indices = @transform_10, window_bounds = array<i64: 9, 128>}, {pipeline_mode = #tpu.pipeline_mode<synchronous>, transform_indices = @transform_11, window_bounds = array<i64: 128, 64>}, {pipeline_mode = #tpu.pipeline_mode<synchronous>, transform_indices = @transform_12, window_bounds = array<i64: 1, 64>}, {pipeline_mode = #tpu.pipeline_mode<synchronous>, transform_indices = @transform_13, window_bounds = array<i64: 1, 64>}, {transform_indices = @transform_14, window_bounds = array<i64: 1, 4, 64>}]} {
    %c0 = arith.constant 0 : index
    %c0_0 = arith.constant 0 : index
    %c0_1 = arith.constant 0 : index
    %0 = vector.load %arg1[%c0, %c0_0, %c0_1] : memref<1x16x48xf32, #tpu.memory_space<vmem>>, vector<1x16x48xf32>
    %1 = vector.shape_cast %0 : vector<1x16x48xf32> to vector<16x48xf32>
    %c0_2 = arith.constant 0 : index
    %c0_3 = arith.constant 0 : index
    %2 = vector.load %arg2[%c0_2, %c0_3] : memref<48x128xf32, #tpu.memory_space<vmem>>, vector<48x128xf32>
    %cst = arith.constant dense<0.000000e+00> : vector<16x128xf32>
    %3 = tpu.matmul %1, %2, %cst {dimension_numbers = #tpu.dot_dimension_numbers<[1], [0], [0], [1], [0, 0, 1, 1], [], []>} : vector<16x48xf32>, vector<48x128xf32>, vector<16x128xf32> -> vector<16x128xf32>
    %c0_4 = arith.constant 0 : index
    %c0_5 = arith.constant 0 : index
    %4 = vector.load %arg3[%c0_4, %c0_5] : memref<1x128xf32, #tpu.memory_space<vmem>>, vector<1x128xf32>
    %5 = vector.broadcast %4 : vector<1x128xf32> to vector<16x128xf32>
    %6 = arith.mulf %3, %5 : vector<16x128xf32>
    %c0_6 = arith.constant 0 : index
    %c0_7 = arith.constant 0 : index
    %7 = vector.load %arg4[%c0_6, %c0_7] : memref<1x128xf32, #tpu.memory_space<vmem>>, vector<1x128xf32>
    %8 = vector.broadcast %7 : vector<1x128xf32> to vector<16x128xf32>
    %9 = arith.addf %6, %8 : vector<16x128xf32>
    %cst_8 = arith.constant 0.000000e+00 : f32
    %10 = vector.broadcast %cst_8 : f32 to vector<16x128xf32>
    %11 = arith.maximumf %9, %10 : vector<16x128xf32>
    %cst_9 = arith.constant 0.000000e+00 : f32
    %12 = vector.broadcast %cst_9 : f32 to vector<1x128xf32>
    %c0_10 = arith.constant 0 : index
    %c0_11 = arith.constant 0 : index
    %13 = vector.load %arg16[%c0_10, %c0_11] : memref<18x128xf32, #tpu.memory_space<vmem>>, vector<1x128xf32>
    tpu.vector_store %arg16[%c0_10, %c0_11], %12 {strides = array<i32>} : memref<18x128xf32, #tpu.memory_space<vmem>>, vector<1x128xf32>,
    %c1 = arith.constant 1 : index
    %c0_12 = arith.constant 0 : index
    %14 = vector.load %arg16[%c1, %c0_12] : memref<18x128xf32, #tpu.memory_space<vmem>>, vector<16x128xf32>
    tpu.vector_store %arg16[%c1, %c0_12], %11 {strides = array<i32>} : memref<18x128xf32, #tpu.memory_space<vmem>>, vector<16x128xf32>,
    %cst_13 = arith.constant 0.000000e+00 : f32
    %15 = vector.broadcast %cst_13 : f32 to vector<1x128xf32>
    %c17 = arith.constant 17 : index
    %c0_14 = arith.constant 0 : index
    %16 = vector.load %arg16[%c17, %c0_14] : memref<18x128xf32, #tpu.memory_space<vmem>>, vector<1x128xf32>
    tpu.vector_store %arg16[%c17, %c0_14], %15 {strides = array<i32>} : memref<18x128xf32, #tpu.memory_space<vmem>>, vector<1x128xf32>,
    %17 = tpu.iota {dimensions = array<i32: 1>} : vector<1x128xi32>
    %c8_i32 = arith.constant 8 : i32
    %18 = vector.broadcast %c8_i32 : i32 to vector<1x128xi32>
    %19 = arith.cmpi sge, %17, %18 : vector<1x128xi32>
    %c120_i32 = arith.constant 120 : i32
    %20 = vector.broadcast %c120_i32 : i32 to vector<1x128xi32>
    %21 = arith.cmpi slt, %17, %20 : vector<1x128xi32>
    %c0_15 = arith.constant 0 : index
    %c0_16 = arith.constant 0 : index
    %22 = tpu.strided_load %arg16[%c0_15, %c0_16] {strides = array<i32: 2, 1>} : memref<18x128xf32, #tpu.memory_space<vmem>>, vector<8x128xf32>
    %c1_17 = arith.constant 1 : index
    %c0_18 = arith.constant 0 : index
    %23 = tpu.strided_load %arg16[%c1_17, %c0_18] {strides = array<i32: 2, 1>} : memref<18x128xf32, #tpu.memory_space<vmem>>, vector<8x128xf32>
    %c2 = arith.constant 2 : index
    %c0_19 = arith.constant 0 : index
    %24 = tpu.strided_load %arg16[%c2, %c0_19] {strides = array<i32: 2, 1>} : memref<18x128xf32, #tpu.memory_space<vmem>>, vector<8x128xf32>
    %c0_20 = arith.constant 0 : index
    %c0_21 = arith.constant 0 : index
    %25 = vector.load %arg5[%c0_20, %c0_21] : memref<9x128xf32, #tpu.memory_space<vmem>>, vector<1x128xf32>
    %26 = vector.broadcast %25 : vector<1x128xf32> to vector<8x128xf32>
    %27 = arith.mulf %22, %26 : vector<8x128xf32>
    %c3 = arith.constant 3 : index
    %c0_22 = arith.constant 0 : index
    %28 = vector.load %arg5[%c3, %c0_22] : memref<9x128xf32, #tpu.memory_space<vmem>>, vector<1x128xf32>
    %29 = vector.broadcast %28 : vector<1x128xf32> to vector<8x128xf32>
    %30 = arith.mulf %23, %29 : vector<8x128xf32>
    %31 = arith.addf %27, %30 : vector<8x128xf32>
    %c6 = arith.constant 6 : index
    %c0_23 = arith.constant 0 : index
    %32 = vector.load %arg5[%c6, %c0_23] : memref<9x128xf32, #tpu.memory_space<vmem>>, vector<1x128xf32>
    %33 = vector.broadcast %32 : vector<1x128xf32> to vector<8x128xf32>
    %34 = arith.mulf %24, %33 : vector<8x128xf32>
    %35 = arith.addf %31, %34 : vector<8x128xf32>
    %c1_24 = arith.constant 1 : index
    %c0_25 = arith.constant 0 : index
    %36 = vector.load %arg5[%c1_24, %c0_25] : memref<9x128xf32, #tpu.memory_space<vmem>>, vector<1x128xf32>
    %37 = vector.broadcast %36 : vector<1x128xf32> to vector<8x128xf32>
    %38 = arith.mulf %22, %37 : vector<8x128xf32>
    %c4 = arith.constant 4 : index
    %c0_26 = arith.constant 0 : index
    %39 = vector.load %arg5[%c4, %c0_26] : memref<9x128xf32, #tpu.memory_space<vmem>>, vector<1x128xf32>
    %40 = vector.broadcast %39 : vector<1x128xf32> to vector<8x128xf32>
    %41 = arith.mulf %23, %40 : vector<8x128xf32>
    %42 = arith.addf %38, %41 : vector<8x128xf32>
    %c7 = arith.constant 7 : index
    %c0_27 = arith.constant 0 : index
    %43 = vector.load %arg5[%c7, %c0_27] : memref<9x128xf32, #tpu.memory_space<vmem>>, vector<1x128xf32>
    %44 = vector.broadcast %43 : vector<1x128xf32> to vector<8x128xf32>
    %45 = arith.mulf %24, %44 : vector<8x128xf32>
    %46 = arith.addf %42, %45 : vector<8x128xf32>
    %c2_28 = arith.constant 2 : index
    %c0_29 = arith.constant 0 : index
    %47 = vector.load %arg5[%c2_28, %c0_29] : memref<9x128xf32, #tpu.memory_space<vmem>>, vector<1x128xf32>
    %48 = vector.broadcast %47 : vector<1x128xf32> to vector<8x128xf32>
    %49 = arith.mulf %22, %48 : vector<8x128xf32>
    %c5 = arith.constant 5 : index
    %c0_30 = arith.constant 0 : index
    %50 = vector.load %arg5[%c5, %c0_30] : memref<9x128xf32, #tpu.memory_space<vmem>>, vector<1x128xf32>
    %51 = vector.broadcast %50 : vector<1x128xf32> to vector<8x128xf32>
    %52 = arith.mulf %23, %51 : vector<8x128xf32>
    %53 = arith.addf %49, %52 : vector<8x128xf32>
    %c8 = arith.constant 8 : index
    %c0_31 = arith.constant 0 : index
    %54 = vector.load %arg5[%c8, %c0_31] : memref<9x128xf32, #tpu.memory_space<vmem>>, vector<1x128xf32>
    %55 = vector.broadcast %54 : vector<1x128xf32> to vector<8x128xf32>
    %56 = arith.mulf %24, %55 : vector<8x128xf32>
    %57 = arith.addf %53, %56 : vector<8x128xf32>
    %c8_i32_32 = arith.constant 8 : i32
    %58 = tpu.dynamic_rotate %35 by %c8_i32_32 dim 1 : vector<8x128xf32>, i32 -> vector<8x128xf32>
    %cst_33 = arith.constant 0.000000e+00 : f32
    %59 = vector.shape_cast %19 : vector<1x128xi1> to vector<1x128xi1>
    %60 = vector.broadcast %59 : vector<1x128xi1> to vector<8x128xi1>
    %61 = vector.broadcast %cst_33 : f32 to vector<8x128xf32>
    %62 = arith.select %60, %58, %61 : vector<8x128xi1>, vector<8x128xf32>
    %c120_i32_34 = arith.constant 120 : i32
    %63 = tpu.dynamic_rotate %57 by %c120_i32_34 dim 1 : vector<8x128xf32>, i32 -> vector<8x128xf32>
    %cst_35 = arith.constant 0.000000e+00 : f32
    %64 = vector.shape_cast %21 : vector<1x128xi1> to vector<1x128xi1>
    %65 = vector.broadcast %64 : vector<1x128xi1> to vector<8x128xi1>
    %66 = vector.broadcast %cst_35 : f32 to vector<8x128xf32>
    %67 = arith.select %65, %63, %66 : vector<8x128xi1>, vector<8x128xf32>
    %68 = arith.addf %62, %46 : vector<8x128xf32>
    %69 = arith.addf %68, %67 : vector<8x128xf32>
    %c0_36 = arith.constant 0 : index
    %c0_37 = arith.constant 0 : index
    %70 = vector.load %arg6[%c0_36, %c0_37] : memref<1x128xf32, #tpu.memory_space<vmem>>, vector<1x128xf32>
    %71 = vector.broadcast %70 : vector<1x128xf32> to vector<8x128xf32>
    %72 = arith.mulf %69, %71 : vector<8x128xf32>
    %c0_38 = arith.constant 0 : index
    %c0_39 = arith.constant 0 : index
    %73 = vector.load %arg7[%c0_38, %c0_39] : memref<1x128xf32, #tpu.memory_space<vmem>>, vector<1x128xf32>
    %74 = vector.broadcast %73 : vector<1x128xf32> to vector<8x128xf32>
    %75 = arith.addf %72, %74 : vector<8x128xf32>
    %cst_40 = arith.constant 0.000000e+00 : f32
    %76 = vector.broadcast %cst_40 : f32 to vector<8x128xf32>
    %77 = arith.maximumf %75, %76 : vector<8x128xf32>
    %c0_41 = arith.constant 0 : index
    %c0_42 = arith.constant 0 : index
    %78 = vector.load %arg8[%c0_41, %c0_42] : memref<128x128xf32, #tpu.memory_space<vmem>>, vector<128x128xf32>
    %cst_43 = arith.constant dense<0.000000e+00> : vector<8x128xf32>
    %79 = tpu.matmul %77, %78, %cst_43 {dimension_numbers = #tpu.dot_dimension_numbers<[1], [0], [0], [1], [0, 0, 1, 1], [], []>} : vector<8x128xf32>, vector<128x128xf32>, vector<8x128xf32> -> vector<8x128xf32>
    %c0_44 = arith.constant 0 : index
    %c0_45 = arith.constant 0 : index
    %80 = vector.load %arg9[%c0_44, %c0_45] : memref<1x128xf32, #tpu.memory_space<vmem>>, vector<1x128xf32>
    %81 = vector.broadcast %80 : vector<1x128xf32> to vector<8x128xf32>
    %82 = arith.mulf %79, %81 : vector<8x128xf32>
    %c0_46 = arith.constant 0 : index
    %c0_47 = arith.constant 0 : index
    %83 = vector.load %arg10[%c0_46, %c0_47] : memref<1x128xf32, #tpu.memory_space<vmem>>, vector<1x128xf32>
    %84 = vector.broadcast %83 : vector<1x128xf32> to vector<8x128xf32>
    %85 = arith.addf %82, %84 : vector<8x128xf32>
    %cst_48 = arith.constant 0.000000e+00 : f32
    %86 = vector.broadcast %cst_48 : f32 to vector<8x128xf32>
    %87 = arith.maximumf %85, %86 : vector<8x128xf32>
    %cst_49 = arith.constant 0.000000e+00 : f32
    %88 = vector.broadcast %cst_49 : f32 to vector<1x128xf32>
    %c0_50 = arith.constant 0 : index
    %c0_51 = arith.constant 0 : index
    %89 = vector.load %arg17[%c0_50, %c0_51] : memref<10x128xf32, #tpu.memory_space<vmem>>, vector<1x128xf32>
    tpu.vector_store %arg17[%c0_50, %c0_51], %88 {strides = array<i32>} : memref<10x128xf32, #tpu.memory_space<vmem>>, vector<1x128xf32>,
    %c1_52 = arith.constant 1 : index
    %c0_53 = arith.constant 0 : index
    %90 = vector.load %arg17[%c1_52, %c0_53] : memref<10x128xf32, #tpu.memory_space<vmem>>, vector<8x128xf32>
    tpu.vector_store %arg17[%c1_52, %c0_53], %87 {strides = array<i32>} : memref<10x128xf32, #tpu.memory_space<vmem>>, vector<8x128xf32>,
    %cst_54 = arith.constant 0.000000e+00 : f32
    %91 = vector.broadcast %cst_54 : f32 to vector<1x128xf32>
    %c9 = arith.constant 9 : index
    %c0_55 = arith.constant 0 : index
    %92 = vector.load %arg17[%c9, %c0_55] : memref<10x128xf32, #tpu.memory_space<vmem>>, vector<1x128xf32>
    tpu.vector_store %arg17[%c9, %c0_55], %91 {strides = array<i32>} : memref<10x128xf32, #tpu.memory_space<vmem>>, vector<1x128xf32>,
    %93 = tpu.iota {dimensions = array<i32: 1>} : vector<1x128xi32>
    %c16_i32 = arith.constant 16 : i32
    %94 = vector.broadcast %c16_i32 : i32 to vector<1x128xi32>
    %95 = arith.cmpi sge, %93, %94 : vector<1x128xi32>
    %c112_i32 = arith.constant 112 : i32
    %96 = vector.broadcast %c112_i32 : i32 to vector<1x128xi32>
    %97 = arith.cmpi slt, %93, %96 : vector<1x128xi32>
    %c0_56 = arith.constant 0 : index
    %c0_57 = arith.constant 0 : index
    %98 = tpu.strided_load %arg17[%c0_56, %c0_57] {strides = array<i32: 2, 1>} : memref<10x128xf32, #tpu.memory_space<vmem>>, vector<4x128xf32>
    %c1_58 = arith.constant 1 : index
    %c0_59 = arith.constant 0 : index
    %99 = tpu.strided_load %arg17[%c1_58, %c0_59] {strides = array<i32: 2, 1>} : memref<10x128xf32, #tpu.memory_space<vmem>>, vector<4x128xf32>
    %c2_60 = arith.constant 2 : index
    %c0_61 = arith.constant 0 : index
    %100 = tpu.strided_load %arg17[%c2_60, %c0_61] {strides = array<i32: 2, 1>} : memref<10x128xf32, #tpu.memory_space<vmem>>, vector<4x128xf32>
    %c0_62 = arith.constant 0 : index
    %c0_63 = arith.constant 0 : index
    %101 = vector.load %arg11[%c0_62, %c0_63] : memref<9x128xf32, #tpu.memory_space<vmem>>, vector<1x128xf32>
    %102 = vector.broadcast %101 : vector<1x128xf32> to vector<4x128xf32>
    %103 = arith.mulf %98, %102 : vector<4x128xf32>
    %c3_64 = arith.constant 3 : index
    %c0_65 = arith.constant 0 : index
    %104 = vector.load %arg11[%c3_64, %c0_65] : memref<9x128xf32, #tpu.memory_space<vmem>>, vector<1x128xf32>
    %105 = vector.broadcast %104 : vector<1x128xf32> to vector<4x128xf32>
    %106 = arith.mulf %99, %105 : vector<4x128xf32>
    %107 = arith.addf %103, %106 : vector<4x128xf32>
    %c6_66 = arith.constant 6 : index
    %c0_67 = arith.constant 0 : index
    %108 = vector.load %arg11[%c6_66, %c0_67] : memref<9x128xf32, #tpu.memory_space<vmem>>, vector<1x128xf32>
    %109 = vector.broadcast %108 : vector<1x128xf32> to vector<4x128xf32>
    %110 = arith.mulf %100, %109 : vector<4x128xf32>
    %111 = arith.addf %107, %110 : vector<4x128xf32>
    %c1_68 = arith.constant 1 : index
    %c0_69 = arith.constant 0 : index
    %112 = vector.load %arg11[%c1_68, %c0_69] : memref<9x128xf32, #tpu.memory_space<vmem>>, vector<1x128xf32>
    %113 = vector.broadcast %112 : vector<1x128xf32> to vector<4x128xf32>
    %114 = arith.mulf %98, %113 : vector<4x128xf32>
    %c4_70 = arith.constant 4 : index
    %c0_71 = arith.constant 0 : index
    %115 = vector.load %arg11[%c4_70, %c0_71] : memref<9x128xf32, #tpu.memory_space<vmem>>, vector<1x128xf32>
    %116 = vector.broadcast %115 : vector<1x128xf32> to vector<4x128xf32>
    %117 = arith.mulf %99, %116 : vector<4x128xf32>
    %118 = arith.addf %114, %117 : vector<4x128xf32>
    %c7_72 = arith.constant 7 : index
    %c0_73 = arith.constant 0 : index
    %119 = vector.load %arg11[%c7_72, %c0_73] : memref<9x128xf32, #tpu.memory_space<vmem>>, vector<1x128xf32>
    %120 = vector.broadcast %119 : vector<1x128xf32> to vector<4x128xf32>
    %121 = arith.mulf %100, %120 : vector<4x128xf32>
    %122 = arith.addf %118, %121 : vector<4x128xf32>
    %c2_74 = arith.constant 2 : index
    %c0_75 = arith.constant 0 : index
    %123 = vector.load %arg11[%c2_74, %c0_75] : memref<9x128xf32, #tpu.memory_space<vmem>>, vector<1x128xf32>
    %124 = vector.broadcast %123 : vector<1x128xf32> to vector<4x128xf32>
    %125 = arith.mulf %98, %124 : vector<4x128xf32>
    %c5_76 = arith.constant 5 : index
    %c0_77 = arith.constant 0 : index
    %126 = vector.load %arg11[%c5_76, %c0_77] : memref<9x128xf32, #tpu.memory_space<vmem>>, vector<1x128xf32>
    %127 = vector.broadcast %126 : vector<1x128xf32> to vector<4x128xf32>
    %128 = arith.mulf %99, %127 : vector<4x128xf32>
    %129 = arith.addf %125, %128 : vector<4x128xf32>
    %c8_78 = arith.constant 8 : index
    %c0_79 = arith.constant 0 : index
    %130 = vector.load %arg11[%c8_78, %c0_79] : memref<9x128xf32, #tpu.memory_space<vmem>>, vector<1x128xf32>
    %131 = vector.broadcast %130 : vector<1x128xf32> to vector<4x128xf32>
    %132 = arith.mulf %100, %131 : vector<4x128xf32>
    %133 = arith.addf %129, %132 : vector<4x128xf32>
    %c16_i32_80 = arith.constant 16 : i32
    %134 = tpu.dynamic_rotate %111 by %c16_i32_80 dim 1 : vector<4x128xf32>, i32 -> vector<4x128xf32>
    %cst_81 = arith.constant 0.000000e+00 : f32
    %135 = vector.shape_cast %95 : vector<1x128xi1> to vector<1x128xi1>
    %136 = vector.broadcast %135 : vector<1x128xi1> to vector<4x128xi1>
    %137 = vector.broadcast %cst_81 : f32 to vector<4x128xf32>
    %138 = arith.select %136, %134, %137 : vector<4x128xi1>, vector<4x128xf32>
    %c112_i32_82 = arith.constant 112 : i32
    %139 = tpu.dynamic_rotate %133 by %c112_i32_82 dim 1 : vector<4x128xf32>, i32 -> vector<4x128xf32>
    %cst_83 = arith.constant 0.000000e+00 : f32
    %140 = vector.shape_cast %97 : vector<1x128xi1> to vector<1x128xi1>
    %141 = vector.broadcast %140 : vector<1x128xi1> to vector<4x128xi1>
    %142 = vector.broadcast %cst_83 : f32 to vector<4x128xf32>
    %143 = arith.select %141, %139, %142 : vector<4x128xi1>, vector<4x128xf32>
    %144 = arith.addf %138, %122 : vector<4x128xf32>
    %145 = arith.addf %144, %143 : vector<4x128xf32>
    %c0_84 = arith.constant 0 : index
    %c0_85 = arith.constant 0 : index
    %146 = vector.load %arg12[%c0_84, %c0_85] : memref<128x64xf32, #tpu.memory_space<vmem>>, vector<128x64xf32>
    %cst_86 = arith.constant dense<0.000000e+00> : vector<4x64xf32>
    %147 = tpu.matmul %145, %146, %cst_86 {dimension_numbers = #tpu.dot_dimension_numbers<[1], [0], [0], [1], [0, 0, 1, 1], [], []>} : vector<4x128xf32>, vector<128x64xf32>, vector<4x64xf32> -> vector<4x64xf32>
    %c0_87 = arith.constant 0 : index
    %c0_88 = arith.constant 0 : index
    %148 = vector.load %arg13[%c0_87, %c0_88] : memref<1x64xf32, #tpu.memory_space<vmem>>, vector<1x64xf32>
    %149 = vector.broadcast %148 : vector<1x64xf32> to vector<4x64xf32>
    %150 = arith.mulf %147, %149 : vector<4x64xf32>
    %c0_89 = arith.constant 0 : index
    %c0_90 = arith.constant 0 : index
    %151 = vector.load %arg14[%c0_89, %c0_90] : memref<1x64xf32, #tpu.memory_space<vmem>>, vector<1x64xf32>
    %152 = vector.broadcast %151 : vector<1x64xf32> to vector<4x64xf32>
    %153 = arith.addf %150, %152 : vector<4x64xf32>
    %cst_91 = arith.constant 0.000000e+00 : f32
    %154 = vector.broadcast %cst_91 : f32 to vector<4x64xf32>
    %155 = arith.maximumf %153, %154 : vector<4x64xf32>
    %c0_92 = arith.constant 0 : index
    %c0_93 = arith.constant 0 : index
    %c0_94 = arith.constant 0 : index
    %156 = vector.load %arg15[%c0_92, %c0_93, %c0_94] : memref<1x4x64xf32, #tpu.memory_space<vmem>>, vector<1x4x64xf32>
    %157 = vector.shape_cast %156 : vector<1x4x64xf32> to vector<4x64xf32>
    %158 = vector.shape_cast %155 : vector<4x64xf32> to vector<1x4x64xf32>
    tpu.vector_store %arg15[%c0_92, %c0_93, %c0_94], %158 {strides = array<i32>} : memref<1x4x64xf32, #tpu.memory_space<vmem>>, vector<1x4x64xf32>,
    return
  }
  func.func @transform_0(%arg0: i32) -> (i32, i32, i32) {
    %c0_i32 = arith.constant 0 : i32
    %c0_i32_0 = arith.constant 0 : i32
    %c0_i32_1 = arith.constant 0 : i32
    return %arg0, %c0_i32, %c0_i32_0 : i32, i32, i32
  }
  func.func @transform_1(%arg0: i32) -> (i32, i32) {
    %c0_i32 = arith.constant 0 : i32
    %c0_i32_0 = arith.constant 0 : i32
    %c0_i32_1 = arith.constant 0 : i32
    return %c0_i32, %c0_i32_0 : i32, i32
  }
  func.func @transform_2(%arg0: i32) -> (i32, i32) {
    %c0_i32 = arith.constant 0 : i32
    %c0_i32_0 = arith.constant 0 : i32
    %c0_i32_1 = arith.constant 0 : i32
    return %c0_i32, %c0_i32_0 : i32, i32
  }
  func.func @transform_3(%arg0: i32) -> (i32, i32) {
    %c0_i32 = arith.constant 0 : i32
    %c0_i32_0 = arith.constant 0 : i32
    %c0_i32_1 = arith.constant 0 : i32
    return %c0_i32, %c0_i32_0 : i32, i32
  }
  func.func @transform_4(%arg0: i32) -> (i32, i32) {
    %c0_i32 = arith.constant 0 : i32
    %c0_i32_0 = arith.constant 0 : i32
    %c0_i32_1 = arith.constant 0 : i32
    return %c0_i32, %c0_i32_0 : i32, i32
  }
  func.func @transform_5(%arg0: i32) -> (i32, i32) {
    %c0_i32 = arith.constant 0 : i32
    %c0_i32_0 = arith.constant 0 : i32
    %c0_i32_1 = arith.constant 0 : i32
    return %c0_i32, %c0_i32_0 : i32, i32
  }
  func.func @transform_6(%arg0: i32) -> (i32, i32) {
    %c0_i32 = arith.constant 0 : i32
    %c0_i32_0 = arith.constant 0 : i32
    %c0_i32_1 = arith.constant 0 : i32
    return %c0_i32, %c0_i32_0 : i32, i32
  }
  func.func @transform_7(%arg0: i32) -> (i32, i32) {
    %c0_i32 = arith.constant 0 : i32
    %c0_i32_0 = arith.constant 0 : i32
    %c0_i32_1 = arith.constant 0 : i32
    return %c0_i32, %c0_i32_0 : i32, i32
  }
  func.func @transform_8(%arg0: i32) -> (i32, i32) {
    %c0_i32 = arith.constant 0 : i32
    %c0_i32_0 = arith.constant 0 : i32
    %c0_i32_1 = arith.constant 0 : i32
    return %c0_i32, %c0_i32_0 : i32, i32
  }
  func.func @transform_9(%arg0: i32) -> (i32, i32) {
    %c0_i32 = arith.constant 0 : i32
    %c0_i32_0 = arith.constant 0 : i32
    %c0_i32_1 = arith.constant 0 : i32
    return %c0_i32, %c0_i32_0 : i32, i32
  }
  func.func @transform_10(%arg0: i32) -> (i32, i32) {
    %c0_i32 = arith.constant 0 : i32
    %c0_i32_0 = arith.constant 0 : i32
    %c0_i32_1 = arith.constant 0 : i32
    return %c0_i32, %c0_i32_0 : i32, i32
  }
  func.func @transform_11(%arg0: i32) -> (i32, i32) {
    %c0_i32 = arith.constant 0 : i32
    %c0_i32_0 = arith.constant 0 : i32
    %c0_i32_1 = arith.constant 0 : i32
    return %c0_i32, %c0_i32_0 : i32, i32
  }
  func.func @transform_12(%arg0: i32) -> (i32, i32) {
    %c0_i32 = arith.constant 0 : i32
    %c0_i32_0 = arith.constant 0 : i32
    %c0_i32_1 = arith.constant 0 : i32
    return %c0_i32, %c0_i32_0 : i32, i32
  }
  func.func @transform_13(%arg0: i32) -> (i32, i32) {
    %c0_i32 = arith.constant 0 : i32
    %c0_i32_0 = arith.constant 0 : i32
    %c0_i32_1 = arith.constant 0 : i32
    return %c0_i32, %c0_i32_0 : i32, i32
  }
  func.func @transform_14(%arg0: i32) -> (i32, i32, i32) {
    %c0_i32 = arith.constant 0 : i32
    %c0_i32_0 = arith.constant 0 : i32
    %c0_i32_1 = arith.constant 0 : i32
    return %arg0, %c0_i32, %c0_i32_0 : i32, i32, i32
  }
}

</mosaic_0001>

<llo_original>
// kernel: tpu_custom_call.1
$region0: #{tpu_custom_call.1}
  #allocation0 [shape = 'u32[]', space=smem, size = 0x4, offset = 0x4, fixed_abs, tag = 'smem constant byte address 0x4 - core index']
  #allocation1 [shape = 'u32[144,128]{1,0:T(1,128)}', space=vmem, size = 0x12000, scoped, tag = 'internal scratch']
  #allocation2 [shape = 'f32[18,128]{1,0:T(8,128)}', space=vmem, size = 0x3000, scoped, tag = 'scratch operand']
  #allocation3 [shape = 'f32[10,128]{1,0:T(8,128)}', space=vmem, size = 0x2000, scoped, tag = 'scratch operand']
  %s0 = inlined_call_operand.hbm [shape: f32[2,16,48], index: 0, kind: input, shape index: {}]
  %s1 = inlined_call_operand.vmem [shape: f32[48,128], index: 1, kind: input, shape index: {}]
  %s2 = inlined_call_operand.vmem [shape: f32[1,128], index: 2, kind: input, shape index: {}]
  %s3 = inlined_call_operand.vmem [shape: f32[1,128], index: 3, kind: input, shape index: {}]
  %s4 = inlined_call_operand.vmem [shape: f32[9,128], index: 4, kind: input, shape index: {}]
  %s5 = inlined_call_operand.hbm [shape: f32[1,128], index: 5, kind: input, shape index: {}]
  %s6 = inlined_call_operand.hbm [shape: f32[1,128], index: 6, kind: input, shape index: {}]
  %s7 = inlined_call_operand.vmem [shape: f32[128,128], index: 7, kind: input, shape index: {}]
  %s8 = inlined_call_operand.hbm [shape: f32[1,128], index: 8, kind: input, shape index: {}]
  %s9 = inlined_call_operand.hbm [shape: f32[1,128], index: 9, kind: input, shape index: {}]
  %s10 = inlined_call_operand.vmem [shape: f32[9,128], index: 10, kind: input, shape index: {}]
  %s11 = inlined_call_operand.vmem [shape: f32[128,64], index: 11, kind: input, shape index: {}]
  %s12 = inlined_call_operand.vmem [shape: f32[1,64], index: 12, kind: input, shape index: {}]
  %s13 = inlined_call_operand.vmem [shape: f32[1,64], index: 13, kind: input, shape index: {}]
  %s14 = inlined_call_operand.hbm [shape: f32[2,4,64], index: 14, kind: output, shape index: {}]
  %s15 = sld [smem:[#allocation0]]
  $region109: #{tpu_custom_call.1} parent=0
    _
  %s17 = ssub.s32 1, %s15
  %s18 = scalar_select 0, %s17, %s15
  $region1: #{tpu_custom_call.1} parent=0
    #allocation4 [shape = 'u8[16384]{0}', space=vmem, size = 0x4000, scoped, tag = 'input window, operand 0']
    #allocation5 [shape = 's32[2]{0}', space=sflag, size = 0x8, scoped, tag = 'scoped memory for tpu_custom_call.1']
    #allocation6 [shape = 's32[2]{0}', space=sflag, size = 0x8, scoped, tag = 'scoped memory for tpu_custom_call.1']
    #allocation7 [shape = 'u8[512]{0}', space=vmem, size = 0x400, scoped, tag = 'input window, operand 5, single buffered']
    #allocation8 [shape = 's32[1]{0}', space=sflag, size = 0x4, scoped, tag = 'scoped memory for tpu_custom_call.1']
    #allocation9 [shape = 'u8[512]{0}', space=vmem, size = 0x400, scoped, tag = 'input window, operand 6, single buffered']
    #allocation10 [shape = 'u8[512]{0}', space=vmem, size = 0x400, scoped, tag = 'input window, operand 8, single buffered']
    #allocation11 [shape = 's32[1]{0}', space=sflag, size = 0x4, scoped, tag = 'scoped memory for tpu_custom_call.1']
    #allocation12 [shape = 'u8[512]{0}', space=vmem, size = 0x400, scoped, tag = 'input window, operand 9, single buffered']
    #allocation13 [shape = 'u8[4096]{0}', space=vmem, size = 0x1000, scoped, tag = 'output window, operand 0']
    %19 = vsyncpa [#allocation5], 0
    %s20 = scalar_lea.sflag [#allocation5], 1
    %21 = vsyncpa %s20, 0
    %22 = vsyncpa [#allocation8], 0
    %23 = vsyncpa [#allocation11], 0
    %24 = vsyncpa [#allocation6], 0
    %s25 = scalar_lea.sflag [#allocation6], 1
    %26 = vsyncpa %s25, 0
    loop: start=0, step=1, limit=4
    $region2: #{tpu_custom_call.1} parent=1 // loop_pre_header
      _
    $region3: #{tpu_custom_call.1} parent=1 // loop_header
      %s28 = sphi 0, %s32
      %p29 = scmp.ge.s32.totalorder %s28, 4
      %s38 = sphi 0, %s40
      %s41 = sphi 0, %s38
      %s42 = sphi 0, %s41
      %s58 = sphi 0, %s42
      %s62 = sphi 0, %s62
      %s64 = sphi 0, %s62
      %s65 = sphi 0, %s64
      %s79 = sphi 0, %s65
      %s83 = sphi 0, %s83
      %s85 = sphi 0, %s83
      %s86 = sphi 0, %s85
      %s100 = sphi 0, %s86
      %s104 = sphi 0, %s104
      %s106 = sphi 0, %s104
      %s107 = sphi 0, %s106
      %s121 = sphi 0, %s107
      %s125 = sphi 0, %s125
      %s127 = sphi 0, %s125
      %s128 = sphi 0, %s127
      %s142 = sphi 0, %s128
      %s146 = sphi 0, %s146
      %s148 = sphi 0, %s146
      %s149 = sphi 0, %s148
      %s163 = sphi 0, %s149
      %s167 = sphi 0, %s167
      %s169 = sphi 0, %s167
      %s170 = sphi 0, %s169
      %s184 = sphi 0, %s170
      %s188 = sphi 0, %s188
      %s190 = sphi 0, %s188
      %s191 = sphi 0, %s190
      %s205 = sphi 0, %s191
      %s209 = sphi 0, %s209
      %s211 = sphi 0, %s209
      %s212 = sphi 0, %s211
      %s226 = sphi 0, %s212
      %s230 = sphi 0, %s230
      %s232 = sphi 0, %s230
      %s233 = sphi 0, %s232
      %s247 = sphi 0, %s233
      %s251 = sphi 0, %s251
      %s253 = sphi 0, %s251
      %s254 = sphi 0, %s253
      %s268 = sphi 0, %s254
      %s272 = sphi 0, %s272
      %s274 = sphi 0, %s272
      %s275 = sphi 0, %s274
      %s289 = sphi 0, %s275
      %s293 = sphi 0, %s293
      %s295 = sphi 0, %s293
      %s296 = sphi 0, %s295
      %s310 = sphi 0, %s296
      %s314 = sphi 0, %s314
      %s316 = sphi 0, %s314
      %s317 = sphi 0, %s316
      %s331 = sphi 0, %s317
      %s337 = sphi 0, %s339
      %s340 = sphi 0, %s337
      %s341 = sphi 0, %s340
      %s357 = sphi 0, %s341
    $region4: #{tpu_custom_call.1} parent=1 // loop_header_branch
      %31 = sbr.rel (%p29) target = $region8
    $region5: #{tpu_custom_call.1} parent=1 // loop_body
      %s33 = ssub.s32 %s28, 1
      %s34 = ssub.s32 %s28, 2
      %s35 = sadd.s32 %s28, 1
      %s36 = ssub.s32 %s28, %s35
      %p37 = scmp.eq.s32.totalorder %s36, 0
      %s39 = sadd.s32 %s38, 1
      %s40 = scalar_select %p37, %s38, %s39
      %p43 = pneg %p37
      %p44 = scmp.eq.s32.totalorder %s28, 1
      %p45 = por %p43, %p44
      %p46 = scmp.ne.s32.totalorder %s38, %s41
      %p47 = scmp.eq.s32.totalorder %s28, 0
      %p48 = por %p46, %p47
      %p49 = scmp.ne.s32.totalorder %s38, %s41
      %p50 = scmp.eq.s32.totalorder %s33, 1
      %p51 = por %p49, %p50
      %p52 = scmp.ne.s32.totalorder %s41, %s42
      %p53 = scmp.eq.s32.totalorder %s33, 0
      %p54 = por %p52, %p53
      %p55 = scmp.ne.s32.totalorder %s41, %s42
      %p56 = scmp.eq.s32.totalorder %s34, 1
      %p57 = por %p55, %p56
      %p59 = scmp.ne.s32.totalorder %s42, %s58
      %p60 = scmp.eq.s32.totalorder %s34, 0
      %p61 = por %p59, %p60
      %s63 = sadd.s32 %s62, 1
      %p66 = scmp.eq.s32.totalorder %s28, 1
      %p67 = scmp.ne.s32.totalorder %s62, %s64
      %p68 = scmp.eq.s32.totalorder %s28, 0
      %p69 = por %p67, %p68
      %p70 = scmp.ne.s32.totalorder %s62, %s64
      %p71 = scmp.eq.s32.totalorder %s33, 1
      %p72 = por %p70, %p71
      %p73 = scmp.ne.s32.totalorder %s64, %s65
      %p74 = scmp.eq.s32.totalorder %s33, 0
      %p75 = por %p73, %p74
      %p76 = scmp.ne.s32.totalorder %s64, %s65
      %p77 = scmp.eq.s32.totalorder %s34, 1
      %p78 = por %p76, %p77
      %p80 = scmp.ne.s32.totalorder %s65, %s79
      %p81 = scmp.eq.s32.totalorder %s34, 0
      %p82 = por %p80, %p81
      %s84 = sadd.s32 %s83, 1
      %p87 = scmp.eq.s32.totalorder %s28, 1
      %p88 = scmp.ne.s32.totalorder %s83, %s85
      %p89 = scmp.eq.s32.totalorder %s28, 0
      %p90 = por %p88, %p89
      %p91 = scmp.ne.s32.totalorder %s83, %s85
      %p92 = scmp.eq.s32.totalorder %s33, 1
      %p93 = por %p91, %p92
      %p94 = scmp.ne.s32.totalorder %s85, %s86
      %p95 = scmp.eq.s32.totalorder %s33, 0
      %p96 = por %p94, %p95
      %p97 = scmp.ne.s32.totalorder %s85, %s86
      %p98 = scmp.eq.s32.totalorder %s34, 1
      %p99 = por %p97, %p98
      %p101 = scmp.ne.s32.totalorder %s86, %s100
      %p102 = scmp.eq.s32.totalorder %s34, 0
      %p103 = por %p101, %p102
      %s105 = sadd.s32 %s104, 1
      %p108 = scmp.eq.s32.totalorder %s28, 1
      %p109 = scmp.ne.s32.totalorder %s104, %s106
      %p110 = scmp.eq.s32.totalorder %s28, 0
      %p111 = por %p109, %p110
      %p112 = scmp.ne.s32.totalorder %s104, %s106
      %p113 = scmp.eq.s32.totalorder %s33, 1
      %p114 = por %p112, %p113
      %p115 = scmp.ne.s32.totalorder %s106, %s107
      %p116 = scmp.eq.s32.totalorder %s33, 0
      %p117 = por %p115, %p116
      %p118 = scmp.ne.s32.totalorder %s106, %s107
      %p119 = scmp.eq.s32.totalorder %s34, 1
      %p120 = por %p118, %p119
      %p122 = scmp.ne.s32.totalorder %s107, %s121
      %p123 = scmp.eq.s32.totalorder %s34, 0
      %p124 = por %p122, %p123
      %s126 = sadd.s32 %s125, 1
      %p129 = scmp.eq.s32.totalorder %s28, 1
      %p130 = scmp.ne.s32.totalorder %s125, %s127
      %p131 = scmp.eq.s32.totalorder %s28, 0
      %p132 = por %p130, %p131
      %p133 = scmp.ne.s32.totalorder %s125, %s127
      %p134 = scmp.eq.s32.totalorder %s33, 1
      %p135 = por %p133, %p134
      %p136 = scmp.ne.s32.totalorder %s127, %s128
      %p137 = scmp.eq.s32.totalorder %s33, 0
      %p138 = por %p136, %p137
      %p139 = scmp.ne.s32.totalorder %s127, %s128
      %p140 = scmp.eq.s32.totalorder %s34, 1
      %p141 = por %p139, %p140
      %p143 = scmp.ne.s32.totalorder %s128, %s142
      %p144 = scmp.eq.s32.totalorder %s34, 0
      %p145 = por %p143, %p144
      %s147 = sadd.s32 %s146, 1
      %p150 = scmp.eq.s32.totalorder %s28, 1
      %p151 = scmp.ne.s32.totalorder %s146, %s148
      %p152 = scmp.eq.s32.totalorder %s28, 0
      %p153 = por %p151, %p152
      %p154 = scmp.ne.s32.totalorder %s146, %s148
      %p155 = scmp.eq.s32.totalorder %s33, 1
      %p156 = por %p154, %p155
      %p157 = scmp.ne.s32.totalorder %s148, %s149
      %p158 = scmp.eq.s32.totalorder %s33, 0
      %p159 = por %p157, %p158
      %p160 = scmp.ne.s32.totalorder %s148, %s149
      %p161 = scmp.eq.s32.totalorder %s34, 1
      %p162 = por %p160, %p161
      %p164 = scmp.ne.s32.totalorder %s149, %s163
      %p165 = scmp.eq.s32.totalorder %s34, 0
      %p166 = por %p164, %p165
      %s168 = sadd.s32 %s167, 1
      %p171 = scmp.eq.s32.totalorder %s28, 1
      %p172 = scmp.ne.s32.totalorder %s167, %s169
      %p173 = scmp.eq.s32.totalorder %s28, 0
      %p174 = por %p172, %p173
      %p175 = scmp.ne.s32.totalorder %s167, %s169
      %p176 = scmp.eq.s32.totalorder %s33, 1
      %p177 = por %p175, %p176
      %p178 = scmp.ne.s32.totalorder %s169, %s170
      %p179 = scmp.eq.s32.totalorder %s33, 0
      %p180 = por %p178, %p179
      %p181 = scmp.ne.s32.totalorder %s169, %s170
      %p182 = scmp.eq.s32.totalorder %s34, 1
      %p183 = por %p181, %p182
      %p185 = scmp.ne.s32.totalorder %s170, %s184
      %p186 = scmp.eq.s32.totalorder %s34, 0
      %p187 = por %p185, %p186
      %s189 = sadd.s32 %s188, 1
      %p192 = scmp.eq.s32.totalorder %s28, 1
      %p193 = scmp.ne.s32.totalorder %s188, %s190
      %p194 = scmp.eq.s32.totalorder %s28, 0
      %p195 = por %p193, %p194
      %p196 = scmp.ne.s32.totalorder %s188, %s190
      %p197 = scmp.eq.s32.totalorder %s33, 1
      %p198 = por %p196, %p197
      %p199 = scmp.ne.s32.totalorder %s190, %s191
      %p200 = scmp.eq.s32.totalorder %s33, 0
      %p201 = por %p199, %p200
      %p202 = scmp.ne.s32.totalorder %s190, %s191
      %p203 = scmp.eq.s32.totalorder %s34, 1
      %p204 = por %p202, %p203
      %p206 = scmp.ne.s32.totalorder %s191, %s205
      %p207 = scmp.eq.s32.totalorder %s34, 0
      %p208 = por %p206, %p207
      %s210 = sadd.s32 %s209, 1
      %p213 = scmp.eq.s32.totalorder %s28, 1
      %p214 = scmp.ne.s32.totalorder %s209, %s211
      %p215 = scmp.eq.s32.totalorder %s28, 0
      %p216 = por %p214, %p215
      %p217 = scmp.ne.s32.totalorder %s209, %s211
      %p218 = scmp.eq.s32.totalorder %s33, 1
      %p219 = por %p217, %p218
      %p220 = scmp.ne.s32.totalorder %s211, %s212
      %p221 = scmp.eq.s32.totalorder %s33, 0
      %p222 = por %p220, %p221
      %p223 = scmp.ne.s32.totalorder %s211, %s212
      %p224 = scmp.eq.s32.totalorder %s34, 1
      %p225 = por %p223, %p224
      %p227 = scmp.ne.s32.totalorder %s212, %s226
      %p228 = scmp.eq.s32.totalorder %s34, 0
      %p229 = por %p227, %p228
      %s231 = sadd.s32 %s230, 1
      %p234 = scmp.eq.s32.totalorder %s28, 1
      %p235 = scmp.ne.s32.totalorder %s230, %s232
      %p236 = scmp.eq.s32.totalorder %s28, 0
      %p237 = por %p235, %p236
      %p238 = scmp.ne.s32.totalorder %s230, %s232
      %p239 = scmp.eq.s32.totalorder %s33, 1
      %p240 = por %p238, %p239
      %p241 = scmp.ne.s32.totalorder %s232, %s233
      %p242 = scmp.eq.s32.totalorder %s33, 0
      %p243 = por %p241, %p242
      %p244 = scmp.ne.s32.totalorder %s232, %s233
      %p245 = scmp.eq.s32.totalorder %s34, 1
      %p246 = por %p244, %p245
      %p248 = scmp.ne.s32.totalorder %s233, %s247
      %p249 = scmp.eq.s32.totalorder %s34, 0
      %p250 = por %p248, %p249
      %s252 = sadd.s32 %s251, 1
      %p255 = scmp.eq.s32.totalorder %s28, 1
      %p256 = scmp.ne.s32.totalorder %s251, %s253
      %p257 = scmp.eq.s32.totalorder %s28, 0
      %p258 = por %p256, %p257
      %p259 = scmp.ne.s32.totalorder %s251, %s253
      %p260 = scmp.eq.s32.totalorder %s33, 1
      %p261 = por %p259, %p260
      %p262 = scmp.ne.s32.totalorder %s253, %s254
      %p263 = scmp.eq.s32.totalorder %s33, 0
      %p264 = por %p262, %p263
      %p265 = scmp.ne.s32.totalorder %s253, %s254
      %p266 = scmp.eq.s32.totalorder %s34, 1
      %p267 = por %p265, %p266
      %p269 = scmp.ne.s32.totalorder %s254, %s268
      %p270 = scmp.eq.s32.totalorder %s34, 0
      %p271 = por %p269, %p270
      %s273 = sadd.s32 %s272, 1
      %p276 = scmp.eq.s32.totalorder %s28, 1
      %p277 = scmp.ne.s32.totalorder %s272, %s274
      %p278 = scmp.eq.s32.totalorder %s28, 0
      %p279 = por %p277, %p278
      %p280 = scmp.ne.s32.totalorder %s272, %s274
      %p281 = scmp.eq.s32.totalorder %s33, 1
      %p282 = por %p280, %p281
      %p283 = scmp.ne.s32.totalorder %s274, %s275
      %p284 = scmp.eq.s32.totalorder %s33, 0
      %p285 = por %p283, %p284
      %p286 = scmp.ne.s32.totalorder %s274, %s275
      %p287 = scmp.eq.s32.totalorder %s34, 1
      %p288 = por %p286, %p287
      %p290 = scmp.ne.s32.totalorder %s275, %s289
      %p291 = scmp.eq.s32.totalorder %s34, 0
      %p292 = por %p290, %p291
      %s294 = sadd.s32 %s293, 1
      %p297 = scmp.eq.s32.totalorder %s28, 1
      %p298 = scmp.ne.s32.totalorder %s293, %s295
      %p299 = scmp.eq.s32.totalorder %s28, 0
      %p300 = por %p298, %p299
      %p301 = scmp.ne.s32.totalorder %s293, %s295
      %p302 = scmp.eq.s32.totalorder %s33, 1
      %p303 = por %p301, %p302
      %p304 = scmp.ne.s32.totalorder %s295, %s296
      %p305 = scmp.eq.s32.totalorder %s33, 0
      %p306 = por %p304, %p305
      %p307 = scmp.ne.s32.totalorder %s295, %s296
      %p308 = scmp.eq.s32.totalorder %s34, 1
      %p309 = por %p307, %p308
      %p311 = scmp.ne.s32.totalorder %s296, %s310
      %p312 = scmp.eq.s32.totalorder %s34, 0
      %p313 = por %p311, %p312
      %s315 = sadd.s32 %s314, 1
      %p318 = scmp.eq.s32.totalorder %s28, 1
      %p319 = scmp.ne.s32.totalorder %s314, %s316
      %p320 = scmp.eq.s32.totalorder %s28, 0
      %p321 = por %p319, %p320
      %p322 = scmp.ne.s32.totalorder %s314, %s316
      %p323 = scmp.eq.s32.totalorder %s33, 1
      %p324 = por %p322, %p323
      %p325 = scmp.ne.s32.totalorder %s316, %s317
      %p326 = scmp.eq.s32.totalorder %s33, 0
      %p327 = por %p325, %p326
      %p328 = scmp.ne.s32.totalorder %s316, %s317
      %p329 = scmp.eq.s32.totalorder %s34, 1
      %p330 = por %p328, %p329
      %p332 = scmp.ne.s32.totalorder %s317, %s331
      %p333 = scmp.eq.s32.totalorder %s34, 0
      %p334 = por %p332, %p333
      %s335 = ssub.s32 %s28, %s35
      %p336 = scmp.eq.s32.totalorder %s335, 0
      %s338 = sadd.s32 %s337, 1
      %s339 = scalar_select %p336, %s337, %s338
      %p342 = pneg %p336
      %p343 = scmp.eq.s32.totalorder %s28, 1
      %p344 = por %p342, %p343
      %p345 = scmp.ne.s32.totalorder %s337, %s340
      %p346 = scmp.eq.s32.totalorder %s28, 0
      %p347 = por %p345, %p346
      %p348 = scmp.ne.s32.totalorder %s337, %s340
      %p349 = scmp.eq.s32.totalorder %s33, 1
      %p350 = por %p348, %p349
      %p351 = scmp.ne.s32.totalorder %s340, %s341
      %p352 = scmp.eq.s32.totalorder %s33, 0
      %p353 = por %p351, %p352
      %p354 = scmp.ne.s32.totalorder %s340, %s341
      %p355 = scmp.eq.s32.totalorder %s34, 1
      %p356 = por %p354, %p355
      %p358 = scmp.ne.s32.totalorder %s341, %s357
      %p359 = scmp.eq.s32.totalorder %s34, 0
      %p360 = por %p358, %p359
      %p361 = scmp.le.s32.totalorder 1, %s28
      %p362 = scmp.lt.s32.totalorder %s28, 3
      %p363 = pnand %p361, %p362
      %p364 = pneg %p363
      // Predicated region
      $region9: #{tpu_custom_call.1} parent=5 // pred_check
        _
      $region10: #{tpu_custom_call.1} parent=5 // pred_check_branch
        %366 = sbr.rel (%p363) target = $region12
      $region11: #{tpu_custom_call.1} parent=5 // pred_region
        %s367 = ssub.s32 %s28, 1
        // Predicated region
        $region13: #{tpu_custom_call.1} parent=11 // pred_check
          %p368 = pneg %p75
        $region14: #{tpu_custom_call.1} parent=11 // pred_check_branch
          %370 = sbr.rel (%p368) target = $region16
        $region15: #{tpu_custom_call.1} parent=11 // pred_region
          _
        $region16: #{tpu_custom_call.1} parent=11 // pred_fallthru
          _
        // Predicated region
        $region17: #{tpu_custom_call.1} parent=11 // pred_check
          %p371 = pneg %p96
        $region18: #{tpu_custom_call.1} parent=11 // pred_check_branch
          %373 = sbr.rel (%p371) target = $region20
        $region19: #{tpu_custom_call.1} parent=11 // pred_region
          _
        $region20: #{tpu_custom_call.1} parent=11 // pred_fallthru
          _
        // Predicated region
        $region21: #{tpu_custom_call.1} parent=11 // pred_check
          %p374 = pneg %p117
        $region22: #{tpu_custom_call.1} parent=11 // pred_check_branch
          %376 = sbr.rel (%p374) target = $region24
        $region23: #{tpu_custom_call.1} parent=11 // pred_region
          _
        $region24: #{tpu_custom_call.1} parent=11 // pred_fallthru
          _
        // Predicated region
        $region25: #{tpu_custom_call.1} parent=11 // pred_check
          %p377 = pneg %p138
        $region26: #{tpu_custom_call.1} parent=11 // pred_check_branch
          %379 = sbr.rel (%p377) target = $region28
        $region27: #{tpu_custom_call.1} parent=11 // pred_region
          _
        $region28: #{tpu_custom_call.1} parent=11 // pred_fallthru
          _
        // Predicated region
        $region29: #{tpu_custom_call.1} parent=11 // pred_check
          %p380 = pneg %p159
        $region30: #{tpu_custom_call.1} parent=11 // pred_check_branch
          %382 = sbr.rel (%p380) target = $region32
        $region31: #{tpu_custom_call.1} parent=11 // pred_region
          %s384 = ssub.s32 16, 16
          %385 = vsyncadd [#allocation8], %s384
          %s387 = sshll.u32 [#allocation7], 4
          %s388 = int_to_ptr.vmem [resolvable:$true] %s387
          %390 = dma.hbm_to_vmem [thread:$0]  %s5, 16, %s388, [#allocation8]
        $region32: #{tpu_custom_call.1} parent=11 // pred_fallthru
          _
        // Predicated region
        $region33: #{tpu_custom_call.1} parent=11 // pred_check
          %p391 = pneg %p180
        $region34: #{tpu_custom_call.1} parent=11 // pred_check_branch
          %393 = sbr.rel (%p391) target = $region36
        $region35: #{tpu_custom_call.1} parent=11 // pred_region
          %s395 = ssub.s32 16, 16
          %396 = vsyncadd [#allocation8], %s395
          %s398 = sshll.u32 [#allocation9], 4
          %s399 = int_to_ptr.vmem [resolvable:$true] %s398
          %401 = dma.hbm_to_vmem [thread:$0]  %s6, 16, %s399, [#allocation8]
        $region36: #{tpu_custom_call.1} parent=11 // pred_fallthru
          _
        // Predicated region
        $region37: #{tpu_custom_call.1} parent=11 // pred_check
          %p402 = pneg %p201
        $region38: #{tpu_custom_call.1} parent=11 // pred_check_branch
          %404 = sbr.rel (%p402) target = $region40
        $region39: #{tpu_custom_call.1} parent=11 // pred_region
          _
        $region40: #{tpu_custom_call.1} parent=11 // pred_fallthru
          _
        // Predicated region
        $region41: #{tpu_custom_call.1} parent=11 // pred_check
          %p405 = pneg %p222
        $region42: #{tpu_custom_call.1} parent=11 // pred_check_branch
          %407 = sbr.rel (%p405) target = $region44
        $region43: #{tpu_custom_call.1} parent=11 // pred_region
          %s409 = ssub.s32 16, 16
          %410 = vsyncadd [#allocation11], %s409
          %s412 = sshll.u32 [#allocation10], 4
          %s413 = int_to_ptr.vmem [resolvable:$true] %s412
          %415 = dma.hbm_to_vmem [thread:$0]  %s8, 16, %s413, [#allocation11]
        $region44: #{tpu_custom_call.1} parent=11 // pred_fallthru
          _
        // Predicated region
        $region45: #{tpu_custom_call.1} parent=11 // pred_check
          %p416 = pneg %p243
        $region46: #{tpu_custom_call.1} parent=11 // pred_check_branch
          %418 = sbr.rel (%p416) target = $region48
        $region47: #{tpu_custom_call.1} parent=11 // pred_region
          %s420 = ssub.s32 16, 16
          %421 = vsyncadd [#allocation11], %s420
          %s423 = sshll.u32 [#allocation12], 4
          %s424 = int_to_ptr.vmem [resolvable:$true] %s423
          %426 = dma.hbm_to_vmem [thread:$0]  %s9, 16, %s424, [#allocation11]
        $region48: #{tpu_custom_call.1} parent=11 // pred_fallthru
          _
        // Predicated region
        $region49: #{tpu_custom_call.1} parent=11 // pred_check
          %p427 = pneg %p264
        $region50: #{tpu_custom_call.1} parent=11 // pred_check_branch
          %429 = sbr.rel (%p427) target = $region52
        $region51: #{tpu_custom_call.1} parent=11 // pred_region
          _
        $region52: #{tpu_custom_call.1} parent=11 // pred_fallthru
          _
        // Predicated region
        $region53: #{tpu_custom_call.1} parent=11 // pred_check
          %p430 = pneg %p285
        $region54: #{tpu_custom_call.1} parent=11 // pred_check_branch
          %432 = sbr.rel (%p430) target = $region56
        $region55: #{tpu_custom_call.1} parent=11 // pred_region
          _
        $region56: #{tpu_custom_call.1} parent=11 // pred_fallthru
          _
        // Predicated region
        $region57: #{tpu_custom_call.1} parent=11 // pred_check
          %p433 = pneg %p306
        $region58: #{tpu_custom_call.1} parent=11 // pred_check_branch
          %435 = sbr.rel (%p433) target = $region60
        $region59: #{tpu_custom_call.1} parent=11 // pred_region
          _
        $region60: #{tpu_custom_call.1} parent=11 // pred_fallthru
          _
        // Predicated region
        $region61: #{tpu_custom_call.1} parent=11 // pred_check
          %p436 = pneg %p327
        $region62: #{tpu_custom_call.1} parent=11 // pred_check_branch
          %438 = sbr.rel (%p436) target = $region64
        $region63: #{tpu_custom_call.1} parent=11 // pred_region
          _
        $region64: #{tpu_custom_call.1} parent=11 // pred_fallthru
          _
      $region12: #{tpu_custom_call.1} parent=5 // pred_fallthru
        _
      %p439 = scmp.lt.s32.totalorder %s28, 2
      // Predicated region
      $region65: #{tpu_custom_call.1} parent=5 // pred_check
        %p440 = pneg %p439
      $region66: #{tpu_custom_call.1} parent=5 // pred_check_branch
        %442 = sbr.rel (%p440) target = $region68
      $region67: #{tpu_custom_call.1} parent=5 // pred_region
        // Predicated region
        $region69: #{tpu_custom_call.1} parent=67 // pred_check
          %p443 = pneg %p48
        $region70: #{tpu_custom_call.1} parent=67 // pred_check_branch
          %445 = sbr.rel (%p443) target = $region72
        $region71: #{tpu_custom_call.1} parent=67 // pred_region
          %s446 = sand.u32 %s38, 1
          %s447 = scalar_lea.sflag [#allocation5], %s446
          %s448 = sand.u32 %s38, 1
          %s449 = smul.addr %s448, 16
          %s450 = scalar_lea.vmem [#allocation4], %s449
          %s452 = ssub.s32 256, 256
          %453 = vsyncadd %s447, %s452
          %s454 = smul.addr %s28, 2
          %s455 = smul.addr %s454, 128
          %s456 = scalar_lea.hbm %s0, %s455
          %s457 = sshll.u32 %s450, 4
          %s458 = int_to_ptr.vmem [resolvable:$true] %s457
          %463 = dma.hbm_to_vmem [thread:$0]  %s456, 256, %s458, %s447, 128, 128, 8
        $region72: #{tpu_custom_call.1} parent=67 // pred_fallthru
          _
      $region68: #{tpu_custom_call.1} parent=5 // pred_fallthru
        _
      %p464 = scmp.le.s32.totalorder 1, %s28
      %p465 = scmp.lt.s32.totalorder %s28, 3
      %p466 = pnand %p464, %p465
      %p467 = pneg %p466
      // Predicated region
      $region73: #{tpu_custom_call.1} parent=5 // pred_check
        _
      $region74: #{tpu_custom_call.1} parent=5 // pred_check_branch
        %469 = sbr.rel (%p466) target = $region76
      $region75: #{tpu_custom_call.1} parent=5 // pred_region
        %s470 = ssub.s32 %s28, 1
        %s471 = sand.u32 %s41, 1
        %s472 = scalar_lea.sflag [#allocation5], %s471
        %s473 = sand.u32 %s41, 1
        %s474 = smul.addr %s473, 16
        %s475 = scalar_lea.vmem [#allocation4], %s474
        // Predicated region
        $region77: #{tpu_custom_call.1} parent=75 // pred_check
          %p476 = pneg %p54
        $region78: #{tpu_custom_call.1} parent=75 // pred_check_branch
          %478 = sbr.rel (%p476) target = $region80
        $region79: #{tpu_custom_call.1} parent=75 // pred_region
          %479 = dma.done %s472, 256
        $region80: #{tpu_custom_call.1} parent=75 // pred_fallthru
          _
        // Predicated region
        $region81: #{tpu_custom_call.1} parent=75 // pred_check
          %p480 = pneg %p159
        $region82: #{tpu_custom_call.1} parent=75 // pred_check_branch
          %482 = sbr.rel (%p480) target = $region84
        $region83: #{tpu_custom_call.1} parent=75 // pred_region
          %483 = dma.done [#allocation8], 16
        $region84: #{tpu_custom_call.1} parent=75 // pred_fallthru
          _
        // Predicated region
        $region85: #{tpu_custom_call.1} parent=75 // pred_check
          %p484 = pneg %p180
        $region86: #{tpu_custom_call.1} parent=75 // pred_check_branch
          %486 = sbr.rel (%p484) target = $region88
        $region87: #{tpu_custom_call.1} parent=75 // pred_region
          %487 = dma.done [#allocation8], 16
        $region88: #{tpu_custom_call.1} parent=75 // pred_fallthru
          _
        // Predicated region
        $region89: #{tpu_custom_call.1} parent=75 // pred_check
          %p488 = pneg %p222
        $region90: #{tpu_custom_call.1} parent=75 // pred_check_branch
          %490 = sbr.rel (%p488) target = $region92
        $region91: #{tpu_custom_call.1} parent=75 // pred_region
          %491 = dma.done [#allocation11], 16
        $region92: #{tpu_custom_call.1} parent=75 // pred_fallthru
          _
        // Predicated region
        $region93: #{tpu_custom_call.1} parent=75 // pred_check
          %p492 = pneg %p243
        $region94: #{tpu_custom_call.1} parent=75 // pred_check_branch
          %494 = sbr.rel (%p492) target = $region96
        $region95: #{tpu_custom_call.1} parent=75 // pred_region
          %495 = dma.done [#allocation11], 16
        $region96: #{tpu_custom_call.1} parent=75 // pred_fallthru
          _
        %s496 = sand.u32 %s41, 1
        %s497 = scalar_lea.sflag [#allocation5], %s496
        %s498 = sand.u32 %s41, 1
        %s499 = smul.addr %s498, 16
        %s500 = scalar_lea.vmem [#allocation4], %s499
        %p501 = pneg %p54
        %p502 = pneg %p51
        %p503 = pneg %p75
        %p504 = pneg %p72
        %p505 = pneg %p96
        %p506 = pneg %p93
        %p507 = pneg %p117
        %p508 = pneg %p114
        %p509 = pneg %p138
        %p510 = pneg %p135
        %p511 = pneg %p159
        %p512 = pneg %p156
        %p513 = pneg %p180
        %p514 = pneg %p177
        %p515 = pneg %p201
        %p516 = pneg %p198
        %p517 = pneg %p222
        %p518 = pneg %p219
        %p519 = pneg %p243
        %p520 = pneg %p240
        %p521 = pneg %p264
        %p522 = pneg %p261
        %p523 = pneg %p285
        %p524 = pneg %p282
        %p525 = pneg %p306
        %p526 = pneg %p303
        %p527 = pneg %p327
        %p528 = pneg %p324
        %p529 = pneg %p353
        %p530 = pneg %p350
        %s531 = sand.u32 %s340, 1
        %s532 = scalar_lea.sflag [#allocation6], %s531
        %s533 = sand.u32 %s340, 1
        %s534 = smul.addr %s533, 4
        %s535 = scalar_lea.vmem [#allocation13], %s534
        %v536 = vld [vmem:[%s475] sm:$0xff]
        %v537 = vld [vmem:[%s475 + $0x8] sm:$0xff]
        %v538 = vld [vmem:[%s1] sm:$0xff]
        %v539 = vld [vmem:[%s1 + $0x8] sm:$0xff]
        %v540 = vld [vmem:[%s1 + $0x10] sm:$0xff]
        %v541 = vld [vmem:[%s1 + $0x18] sm:$0xff]
        %v542 = vld [vmem:[%s1 + $0x20] sm:$0xff]
        %v543 = vld [vmem:[%s1 + $0x28] sm:$0xff]
        %vm544 = vcmask 392192
        %v546 = vsel %vm544, %v536, 0
        %v549 = vsel %vm544, %v537, 0
        %551 = vmatprep.subr.mxu0 0.0
        %552 = vmatpush1.msra.mxu0 0.0
        %553 = vmatprep.subr.mxu0 0.0
        %554 = vmatpush1.msra.mxu0 0.0
        %555 = vmatprep.subr.mxu0 0.0
        %556 = vmatpush1.msra.mxu0 0.0
        %557 = vmatprep.subr.mxu0 0.0
        %558 = vmatpush1.msra.mxu0 0.0
        %559 = vmatprep.subr.mxu0 0.0
        %560 = vmatpush1.msra.mxu0 0.0
        %561 = vmatprep.subr.mxu0 0.0
        %562 = vmatpush1.msra.mxu0 0.0
        %563 = vmatprep.subr.mxu0 0.0
        %564 = vmatpush1.msra.mxu0 0.0
        %565 = vmatprep.subr.mxu0 0.0
        %566 = vmatpush1.msra.mxu0 0.0
        %567 = vmatprep.subr.mxu0 0.0
        %568 = vmatpush1.msra.mxu0 0.0
        %569 = vmatprep.subr.mxu0 0.0
        %570 = vmatpush1.msra.mxu0 0.0
        %571 = vmatprep.subr.mxu0 0.0
        %572 = vmatpush1.msra.mxu0 %v543
        %573 = vmatprep.subr.mxu0 0.0
        %574 = vmatpush1.msra.mxu0 %v542
        %575 = vmatprep.subr.mxu0 0.0
        %576 = vmatpush1.msra.mxu0 %v541
        %577 = vmatprep.subr.mxu0 0.0
        %578 = vmatpush1.msra.mxu0 %v540
        %579 = vmatprep.subr.mxu0 0.0
        %580 = vmatpush1.msra.mxu0 %v539
        %581 = vmatprep.subr.mxu0 0.0
        %582 = vmatpush1.msra.mxu0 %v538
        %583 = vmatprep.subr.mxu0 0.0
        %584 = vmatpush2.msra.mxu0 0.0
        %585 = vmatprep.subr.mxu0 0.0
        %586 = vmatpush2.msra.mxu0 0.0
        %587 = vmatprep.subr.mxu0 0.0
        %588 = vmatpush2.msra.mxu0 0.0
        %589 = vmatprep.subr.mxu0 0.0
        %590 = vmatpush2.msra.mxu0 0.0
        %591 = vmatprep.subr.mxu0 0.0
        %592 = vmatpush2.msra.mxu0 0.0
        %593 = vmatprep.subr.mxu0 0.0
        %594 = vmatpush2.msra.mxu0 0.0
        %595 = vmatprep.subr.mxu0 0.0
        %596 = vmatpush2.msra.mxu0 0.0
        %597 = vmatprep.subr.mxu0 0.0
        %598 = vmatpush2.msra.mxu0 0.0
        %599 = vmatprep.subr.mxu0 0.0
        %600 = vmatpush2.msra.mxu0 0.0
        %601 = vmatprep.subr.mxu0 0.0
        %602 = vmatpush2.msra.mxu0 0.0
        %603 = vmatprep.subr.mxu0 0.0
        %604 = vmatpush2.msra.mxu0 0.0
        %605 = vmatprep.subr.mxu0 0.0
        %606 = vmatpush2.msra.mxu0 0.0
        %607 = vmatprep.subr.mxu0 0.0
        %608 = vmatpush2.msra.mxu0 0.0
        %609 = vmatprep.subr.mxu0 0.0
        %610 = vmatpush2.msra.mxu0 0.0
        %611 = vmatprep.subr.mxu0 0.0
        %612 = vmatpush2.msra.mxu0 0.0
        %613 = vmatprep.subr.mxu0 0.0
        %614 = vmatpush2.msra.mxu0 0.0
        %615 = vmatprep.mubr.f32.mxu0 0.0
        %616 = vmatmul.mubr.f32.gmra.mxu0 %v546
        %v617 = vpop.f32.mrf.mxu0
        %v618 = vadd.f32 0.0, %v617
        %v619 = vpop.f32.mrf.mxu0
        %620 = vmatprep.mubr.f32.mxu0 0.0
        %621 = vmatmul.mubr.f32.gmra.mxu0 %v549
        %v622 = vpop.f32.mrf.mxu0
        %v623 = vadd.f32 0.0, %v622
        %v624 = vpop.f32.mrf.mxu0
        %625 = vdwg.mxu0
        %v626 = vld [vmem:[%s2] sm:$0x1]
        %v628 = vlaneseq
        %v629 = vshrl.u32 %v628, 7
        %v630 = vsub.s32 0, %v629
        %v631 = vrot.slane %v626, %v630
        %v633 = vmul.f32 %v618, %v631
        %v634 = vmul.f32 %v623, %v631
        %v635 = vld [vmem:[%s3] sm:$0x1]
        %v637 = vlaneseq
        %v638 = vshrl.u32 %v637, 7
        %v639 = vsub.s32 0, %v638
        %v640 = vrot.slane %v635, %v639
        %v642 = vadd.f32 %v633, %v640
        %v643 = vadd.f32 %v634, %v640
        %v644 = vmax.f32 %v642, 0.0
        %v645 = vmax.f32 %v643, 0.0
        %646 = vst [vmem:[#allocation2] sm:$0x1] 0.0
        %647 = vst [vmem:[#allocation2 + $0x1] sm:$0xff] %v644
        %648 = vst [vmem:[#allocation2 + $0x9] sm:$0xff] %v645
        %649 = vst [vmem:[#allocation2 + $0x11] sm:$0x1] 0.0
        %v650 = vlaneseq
        %v651 = vand.u32 %v650, 127
        %vm652 = vcmp.ge.s32.totalorder %v651, 8
        %vm653 = vcmp.lt.s32.totalorder %v651, 120
        %v654 = vld [vmem:[#allocation2] ss:$2 sm:$0xff]
        %s655 = scalar_lea.vmem [#allocation2], 1
        %v656 = vld [vmem:[%s655] ss:$2 sm:$0xff]
        %s657 = scalar_lea.vmem [#allocation2], 2
        %v658 = vld [vmem:[%s657] ss:$2 sm:$0xff]
        %v659 = vld [vmem:[%s4] sm:$0x1]
        %v660 = vlaneseq
        %v661 = vshrl.u32 %v660, 7
        %v662 = vsub.s32 0, %v661
        %v663 = vrot.slane %v659, %v662
        %v664 = vmul.f32 %v654, %v663
        %v665 = vld [vmem:[%s4 + $0x3] sm:$0x1]
        %v666 = vlaneseq
        %v667 = vshrl.u32 %v666, 7
        %v668 = vsub.s32 0, %v667
        %v669 = vrot.slane %v665, %v668
        %v670 = vmul.f32 %v656, %v669
        %v671 = vadd.f32 %v664, %v670
        %v672 = vld [vmem:[%s4 + $0x6] sm:$0x1]
        %v673 = vlaneseq
        %v674 = vshrl.u32 %v673, 7
        %v675 = vsub.s32 0, %v674
        %v676 = vrot.slane %v672, %v675
        %v677 = vmul.f32 %v658, %v676
        %v678 = vadd.f32 %v671, %v677
        %v679 = vld [vmem:[%s4 + $0x1] sm:$0x1]
        %v680 = vlaneseq
        %v681 = vshrl.u32 %v680, 7
        %v682 = vsub.s32 0, %v681
        %v683 = vrot.slane %v679, %v682
        %v684 = vmul.f32 %v654, %v683
        %v685 = vld [vmem:[%s4 + $0x4] sm:$0x1]
        %v686 = vlaneseq
        %v687 = vshrl.u32 %v686, 7
        %v688 = vsub.s32 0, %v687
        %v689 = vrot.slane %v685, %v688
        %v690 = vmul.f32 %v656, %v689
        %v691 = vadd.f32 %v684, %v690
        %v692 = vld [vmem:[%s4 + $0x7] sm:$0x1]
        %v693 = vlaneseq
        %v694 = vshrl.u32 %v693, 7
        %v695 = vsub.s32 0, %v694
        %v696 = vrot.slane %v692, %v695
        %v697 = vmul.f32 %v658, %v696
        %v698 = vadd.f32 %v691, %v697
        %v699 = vld [vmem:[%s4 + $0x2] sm:$0x1]
        %v700 = vlaneseq
        %v701 = vshrl.u32 %v700, 7
        %v702 = vsub.s32 0, %v701
        %v703 = vrot.slane %v699, %v702
        %v704 = vmul.f32 %v654, %v703
        %v705 = vld [vmem:[%s4 + $0x5] sm:$0x1]
        %v706 = vlaneseq
        %v707 = vshrl.u32 %v706, 7
        %v708 = vsub.s32 0, %v707
        %v709 = vrot.slane %v705, %v708
        %v710 = vmul.f32 %v656, %v709
        %v711 = vadd.f32 %v704, %v710
        %v712 = vld [vmem:[%s4 + $0x8] sm:$0x1]
        %v713 = vlaneseq
        %v714 = vshrl.u32 %v713, 7
        %v715 = vsub.s32 0, %v714
        %v716 = vrot.slane %v712, %v715
        %v717 = vmul.f32 %v658, %v716
        %v718 = vadd.f32 %v711, %v717
        %719 = vrot.lane.b32.xlu0 %v678, 8
        %v720 = vpop.permute.xlu0 %719
        %v721 = vsel %vm652, 1, 0
        %vm722 = vcmp.eq.s32.totalorder %v721, 1
        %v723 = vsel %vm722, %v720, 0.0
        %724 = vrot.lane.b32.xlu0 %v718, 120
        %v725 = vpop.permute.xlu0 %724
        %v726 = vsel %vm653, 1, 0
        %vm727 = vcmp.eq.s32.totalorder %v726, 1
        %v728 = vsel %vm727, %v725, 0.0
        %v729 = vadd.f32 %v723, %v698
        %v730 = vadd.f32 %v729, %v728
        %v731 = vld [vmem:[#allocation7] sm:$0x1]
        %v733 = vlaneseq
        %v734 = vshrl.u32 %v733, 7
        %v735 = vsub.s32 0, %v734
        %v736 = vrot.slane %v731, %v735
        %v738 = vmul.f32 %v730, %v736
        %v739 = vld [vmem:[#allocation9] sm:$0x1]
        %v741 = vlaneseq
        %v742 = vshrl.u32 %v741, 7
        %v743 = vsub.s32 0, %v742
        %v744 = vrot.slane %v739, %v743
        %v746 = vadd.f32 %v738, %v744
        %v747 = vmax.f32 %v746, 0.0
        %v748 = vld [vmem:[%s7] sm:$0xff]
        %v749 = vld [vmem:[%s7 + $0x8] sm:$0xff]
        %v750 = vld [vmem:[%s7 + $0x10] sm:$0xff]
        %v751 = vld [vmem:[%s7 + $0x18] sm:$0xff]
        %v752 = vld [vmem:[%s7 + $0x20] sm:$0xff]
        %v753 = vld [vmem:[%s7 + $0x28] sm:$0xff]
        %v754 = vld [vmem:[%s7 + $0x30] sm:$0xff]
        %v755 = vld [vmem:[%s7 + $0x38] sm:$0xff]
        %v756 = vld [vmem:[%s7 + $0x40] sm:$0xff]
        %v757 = vld [vmem:[%s7 + $0x48] sm:$0xff]
        %v758 = vld [vmem:[%s7 + $0x50] sm:$0xff]
        %v759 = vld [vmem:[%s7 + $0x58] sm:$0xff]
        %v760 = vld [vmem:[%s7 + $0x60] sm:$0xff]
        %v761 = vld [vmem:[%s7 + $0x68] sm:$0xff]
        %v762 = vld [vmem:[%s7 + $0x70] sm:$0xff]
        %v763 = vld [vmem:[%s7 + $0x78] sm:$0xff]
        %764 = vmatprep.subr.mxu0 0.0
        %765 = vmatpush1.msra.mxu0 %v763
        %766 = vmatprep.subr.mxu0 0.0
        %767 = vmatpush1.msra.mxu0 %v762
        %768 = vmatprep.subr.mxu0 0.0
        %769 = vmatpush1.msra.mxu0 %v761
        %770 = vmatprep.subr.mxu0 0.0
        %771 = vmatpush1.msra.mxu0 %v760
        %772 = vmatprep.subr.mxu0 0.0
        %773 = vmatpush1.msra.mxu0 %v759
        %774 = vmatprep.subr.mxu0 0.0
        %775 = vmatpush1.msra.mxu0 %v758
        %776 = vmatprep.subr.mxu0 0.0
        %777 = vmatpush1.msra.mxu0 %v757
        %778 = vmatprep.subr.mxu0 0.0
        %779 = vmatpush1.msra.mxu0 %v756
        %780 = vmatprep.subr.mxu0 0.0
        %781 = vmatpush1.msra.mxu0 %v755
        %782 = vmatprep.subr.mxu0 0.0
        %783 = vmatpush1.msra.mxu0 %v754
        %784 = vmatprep.subr.mxu0 0.0
        %785 = vmatpush1.msra.mxu0 %v753
        %786 = vmatprep.subr.mxu0 0.0
        %787 = vmatpush1.msra.mxu0 %v752
        %788 = vmatprep.subr.mxu0 0.0
        %789 = vmatpush1.msra.mxu0 %v751
        %790 = vmatprep.subr.mxu0 0.0
        %791 = vmatpush1.msra.mxu0 %v750
        %792 = vmatprep.subr.mxu0 0.0
        %793 = vmatpush1.msra.mxu0 %v749
        %794 = vmatprep.subr.mxu0 0.0
        %795 = vmatpush1.msra.mxu0 %v748
        %796 = vmatprep.subr.mxu0 0.0
        %797 = vmatpush2.msra.mxu0 0.0
        %798 = vmatprep.subr.mxu0 0.0
        %799 = vmatpush2.msra.mxu0 0.0
        %800 = vmatprep.subr.mxu0 0.0
        %801 = vmatpush2.msra.mxu0 0.0
        %802 = vmatprep.subr.mxu0 0.0
        %803 = vmatpush2.msra.mxu0 0.0
        %804 = vmatprep.subr.mxu0 0.0
        %805 = vmatpush2.msra.mxu0 0.0
        %806 = vmatprep.subr.mxu0 0.0
        %807 = vmatpush2.msra.mxu0 0.0
        %808 = vmatprep.subr.mxu0 0.0
        %809 = vmatpush2.msra.mxu0 0.0
        %810 = vmatprep.subr.mxu0 0.0
        %811 = vmatpush2.msra.mxu0 0.0
        %812 = vmatprep.subr.mxu0 0.0
        %813 = vmatpush2.msra.mxu0 0.0
        %814 = vmatprep.subr.mxu0 0.0
        %815 = vmatpush2.msra.mxu0 0.0
        %816 = vmatprep.subr.mxu0 0.0
        %817 = vmatpush2.msra.mxu0 0.0
        %818 = vmatprep.subr.mxu0 0.0
        %819 = vmatpush2.msra.mxu0 0.0
        %820 = vmatprep.subr.mxu0 0.0
        %821 = vmatpush2.msra.mxu0 0.0
        %822 = vmatprep.subr.mxu0 0.0
        %823 = vmatpush2.msra.mxu0 0.0
        %824 = vmatprep.subr.mxu0 0.0
        %825 = vmatpush2.msra.mxu0 0.0
        %826 = vmatprep.subr.mxu0 0.0
        %827 = vmatpush2.msra.mxu0 0.0
        %828 = vmatprep.mubr.f32.mxu0 0.0
        %829 = vmatmul.mubr.f32.gmra.mxu0 %v747
        %v830 = vpop.f32.mrf.mxu0
        %v831 = vadd.f32 0.0, %v830
        %v832 = vpop.f32.mrf.mxu0
        %833 = vdwg.mxu0
        %v834 = vld [vmem:[#allocation10] sm:$0x1]
        %v836 = vlaneseq
        %v837 = vshrl.u32 %v836, 7
        %v838 = vsub.s32 0, %v837
        %v839 = vrot.slane %v834, %v838
        %v841 = vmul.f32 %v831, %v839
        %v842 = vld [vmem:[#allocation12] sm:$0x1]
        %v844 = vlaneseq
        %v845 = vshrl.u32 %v844, 7
        %v846 = vsub.s32 0, %v845
        %v847 = vrot.slane %v842, %v846
        %v849 = vadd.f32 %v841, %v847
        %v850 = vmax.f32 %v849, 0.0
        %851 = vst [vmem:[#allocation3] sm:$0x1] 0.0
        %852 = vst [vmem:[#allocation3 + $0x1] sm:$0xff] %v850
        %853 = vst [vmem:[#allocation3 + $0x9] sm:$0x1] 0.0
        %vm854 = vcmp.ge.s32.totalorder %v651, 16
        %vm855 = vcmp.lt.s32.totalorder %v651, 112
        %v856 = vld [vmem:[#allocation3] ss:$2 sm:$0xf]
        %s857 = scalar_lea.vmem [#allocation3], 1
        %v858 = vld [vmem:[%s857] ss:$2 sm:$0xf]
        %s859 = scalar_lea.vmem [#allocation3], 2
        %v860 = vld [vmem:[%s859] ss:$2 sm:$0xf]
        %v861 = vld [vmem:[%s10] sm:$0x1]
        %v862 = vlaneseq
        %v863 = vshrl.u32 %v862, 7
        %v864 = vsub.s32 0, %v863
        %v865 = vrot.slane %v861, %v864
        %v866 = vmul.f32 %v856, %v865
        %v867 = vld [vmem:[%s10 + $0x3] sm:$0x1]
        %v868 = vlaneseq
        %v869 = vshrl.u32 %v868, 7
        %v870 = vsub.s32 0, %v869
        %v871 = vrot.slane %v867, %v870
        %v872 = vmul.f32 %v858, %v871
        %v873 = vadd.f32 %v866, %v872
        %v874 = vld [vmem:[%s10 + $0x6] sm:$0x1]
        %v875 = vlaneseq
        %v876 = vshrl.u32 %v875, 7
        %v877 = vsub.s32 0, %v876
        %v878 = vrot.slane %v874, %v877
        %v879 = vmul.f32 %v860, %v878
        %v880 = vadd.f32 %v873, %v879
        %v881 = vld [vmem:[%s10 + $0x1] sm:$0x1]
        %v882 = vlaneseq
        %v883 = vshrl.u32 %v882, 7
        %v884 = vsub.s32 0, %v883
        %v885 = vrot.slane %v881, %v884
        %v886 = vmul.f32 %v856, %v885
        %v887 = vld [vmem:[%s10 + $0x4] sm:$0x1]
        %v888 = vlaneseq
        %v889 = vshrl.u32 %v888, 7
        %v890 = vsub.s32 0, %v889
        %v891 = vrot.slane %v887, %v890
        %v892 = vmul.f32 %v858, %v891
        %v893 = vadd.f32 %v886, %v892
        %v894 = vld [vmem:[%s10 + $0x7] sm:$0x1]
        %v895 = vlaneseq
        %v896 = vshrl.u32 %v895, 7
        %v897 = vsub.s32 0, %v896
        %v898 = vrot.slane %v894, %v897
        %v899 = vmul.f32 %v860, %v898
        %v900 = vadd.f32 %v893, %v899
        %v901 = vld [vmem:[%s10 + $0x2] sm:$0x1]
        %v902 = vlaneseq
        %v903 = vshrl.u32 %v902, 7
        %v904 = vsub.s32 0, %v903
        %v905 = vrot.slane %v901, %v904
        %v906 = vmul.f32 %v856, %v905
        %v907 = vld [vmem:[%s10 + $0x5] sm:$0x1]
        %v908 = vlaneseq
        %v909 = vshrl.u32 %v908, 7
        %v910 = vsub.s32 0, %v909
        %v911 = vrot.slane %v907, %v910
        %v912 = vmul.f32 %v858, %v911
        %v913 = vadd.f32 %v906, %v912
        %v914 = vld [vmem:[%s10 + $0x8] sm:$0x1]
        %v915 = vlaneseq
        %v916 = vshrl.u32 %v915, 7
        %v917 = vsub.s32 0, %v916
        %v918 = vrot.slane %v914, %v917
        %v919 = vmul.f32 %v860, %v918
        %v920 = vadd.f32 %v913, %v919
        %921 = vrot.lane.b32.xlu0 %v880, 16
        %v922 = vpop.permute.xlu0 %921
        %v923 = vsel %vm854, 1, 0
        %vm924 = vcmp.eq.s32.totalorder %v923, 1
        %v925 = vsel %vm924, %v922, 0.0
        %926 = vrot.lane.b32.xlu0 %v920, 112
        %v927 = vpop.permute.xlu0 %926
        %v928 = vsel %vm855, 1, 0
        %vm929 = vcmp.eq.s32.totalorder %v928, 1
        %v930 = vsel %vm929, %v927, 0.0
        %v931 = vadd.f32 %v925, %v900
        %v932 = vadd.f32 %v931, %v930
        %v933 = vld [vmem:[%s11] sm:$0xff]
        %v934 = vld [vmem:[%s11 + $0x8] sm:$0xff]
        %v935 = vld [vmem:[%s11 + $0x10] sm:$0xff]
        %v936 = vld [vmem:[%s11 + $0x18] sm:$0xff]
        %v937 = vld [vmem:[%s11 + $0x20] sm:$0xff]
        %v938 = vld [vmem:[%s11 + $0x28] sm:$0xff]
        %v939 = vld [vmem:[%s11 + $0x30] sm:$0xff]
        %v940 = vld [vmem:[%s11 + $0x38] sm:$0xff]
        %v941 = vld [vmem:[%s11 + $0x40] sm:$0xff]
        %v942 = vld [vmem:[%s11 + $0x48] sm:$0xff]
        %v943 = vld [vmem:[%s11 + $0x50] sm:$0xff]
        %v944 = vld [vmem:[%s11 + $0x58] sm:$0xff]
        %v945 = vld [vmem:[%s11 + $0x60] sm:$0xff]
        %v946 = vld [vmem:[%s11 + $0x68] sm:$0xff]
        %v947 = vld [vmem:[%s11 + $0x70] sm:$0xff]
        %v948 = vld [vmem:[%s11 + $0x78] sm:$0xff]
        %949 = vmatprep.subr.mxu0 0.0
        %950 = vmatpush1.msra.mxu0 %v948
        %951 = vmatprep.subr.mxu0 0.0
        %952 = vmatpush1.msra.mxu0 %v947
        %953 = vmatprep.subr.mxu0 0.0
        %954 = vmatpush1.msra.mxu0 %v946
        %955 = vmatprep.subr.mxu0 0.0
        %956 = vmatpush1.msra.mxu0 %v945
        %957 = vmatprep.subr.mxu0 0.0
        %958 = vmatpush1.msra.mxu0 %v944
        %959 = vmatprep.subr.mxu0 0.0
        %960 = vmatpush1.msra.mxu0 %v943
        %961 = vmatprep.subr.mxu0 0.0
        %962 = vmatpush1.msra.mxu0 %v942
        %963 = vmatprep.subr.mxu0 0.0
        %964 = vmatpush1.msra.mxu0 %v941
        %965 = vmatprep.subr.mxu0 0.0
        %966 = vmatpush1.msra.mxu0 %v940
        %967 = vmatprep.subr.mxu0 0.0
        %968 = vmatpush1.msra.mxu0 %v939
        %969 = vmatprep.subr.mxu0 0.0
        %970 = vmatpush1.msra.mxu0 %v938
        %971 = vmatprep.subr.mxu0 0.0
        %972 = vmatpush1.msra.mxu0 %v937
        %973 = vmatprep.subr.mxu0 0.0
        %974 = vmatpush1.msra.mxu0 %v936
        %975 = vmatprep.subr.mxu0 0.0
        %976 = vmatpush1.msra.mxu0 %v935
        %977 = vmatprep.subr.mxu0 0.0
        %978 = vmatpush1.msra.mxu0 %v934
        %979 = vmatprep.subr.mxu0 0.0
        %980 = vmatpush1.msra.mxu0 %v933
        %981 = vmatprep.subr.mxu0 0.0
        %982 = vmatpush2.msra.mxu0 0.0
        %983 = vmatprep.subr.mxu0 0.0
        %984 = vmatpush2.msra.mxu0 0.0
        %985 = vmatprep.subr.mxu0 0.0
        %986 = vmatpush2.msra.mxu0 0.0
        %987 = vmatprep.subr.mxu0 0.0
        %988 = vmatpush2.msra.mxu0 0.0
        %989 = vmatprep.subr.mxu0 0.0
        %990 = vmatpush2.msra.mxu0 0.0
        %991 = vmatprep.subr.mxu0 0.0
        %992 = vmatpush2.msra.mxu0 0.0
        %993 = vmatprep.subr.mxu0 0.0
        %994 = vmatpush2.msra.mxu0 0.0
        %995 = vmatprep.subr.mxu0 0.0
        %996 = vmatpush2.msra.mxu0 0.0
        %997 = vmatprep.subr.mxu0 0.0
        %998 = vmatpush2.msra.mxu0 0.0
        %999 = vmatprep.subr.mxu0 0.0
        %1000 = vmatpush2.msra.mxu0 0.0
        %1001 = vmatprep.subr.mxu0 0.0
        %1002 = vmatpush2.msra.mxu0 0.0
        %1003 = vmatprep.subr.mxu0 0.0
        %1004 = vmatpush2.msra.mxu0 0.0
        %1005 = vmatprep.subr.mxu0 0.0
        %1006 = vmatpush2.msra.mxu0 0.0
        %1007 = vmatprep.subr.mxu0 0.0
        %1008 = vmatpush2.msra.mxu0 0.0
        %1009 = vmatprep.subr.mxu0 0.0
        %1010 = vmatpush2.msra.mxu0 0.0
        %1011 = vmatprep.subr.mxu0 0.0
        %1012 = vmatpush2.msra.mxu0 0.0
        %1013 = vmatprep.mubr.f32.mxu0 0.0
        %1014 = vmatmul.mubr.f32.gmra.mxu0 %v932
        %v1015 = vpop.f32.mrf.mxu0
        %v1016 = vadd.f32 0.0, %v1015
        %v1017 = vpop.f32.mrf.mxu0
        %1018 = vdwg.mxu0
        %v1019 = vld [vmem:[%s12] sm:$0x1]
        %v1021 = vlaneseq
        %v1022 = vshrl.u32 %v1021, 7
        %v1023 = vsub.s32 0, %v1022
        %v1024 = vrot.slane %v1019, %v1023
        %v1026 = vmul.f32 %v1016, %v1024
        %v1027 = vld [vmem:[%s13] sm:$0x1]
        %v1029 = vlaneseq
        %v1030 = vshrl.u32 %v1029, 7
        %v1031 = vsub.s32 0, %v1030
        %v1032 = vrot.slane %v1027, %v1031
        %v1034 = vadd.f32 %v1026, %v1032
        %v1035 = vmax.f32 %v1034, 0.0
        %vm1036 = vcmask 519168
        %1037 = vst.msk [vmem:[%s535] sm:$0xf] %vm1036, %v1035
        %s1038 = sand.u32 %s340, 1
        %s1039 = scalar_lea.sflag [#allocation6], %s1038
        %s1040 = sand.u32 %s340, 1
        %s1041 = smul.addr %s1040, 4
        %s1042 = scalar_lea.vmem [#allocation13], %s1041
        // Predicated region
        $region97: #{tpu_custom_call.1} parent=75 // pred_check
          %p1043 = pneg %p350
        $region98: #{tpu_custom_call.1} parent=75 // pred_check_branch
          %1045 = sbr.rel (%p1043) target = $region100
        $region99: #{tpu_custom_call.1} parent=75 // pred_region
          %s1047 = ssub.s32 64, 64
          %1048 = vsyncadd %s1039, %s1047
          %s1049 = smul.addr %s33, 64
          %s1050 = scalar_lea.hbm %s14, %s1049
          %s1052 = sshll.u32 %s1042, 4
          %s1053 = int_to_ptr.vmem [resolvable:$true] %s1052
          %1055 = dma.vmem_to_hbm [thread:$0]  %s1053, 64, %s1050, %s1039
        $region100: #{tpu_custom_call.1} parent=75 // pred_fallthru
          _
      $region76: #{tpu_custom_call.1} parent=5 // pred_fallthru
        _
      %p1056 = scmp.le.s32.totalorder 2, %s28
      // Predicated region
      $region101: #{tpu_custom_call.1} parent=5 // pred_check
        %p1057 = pneg %p1056
      $region102: #{tpu_custom_call.1} parent=5 // pred_check_branch
        %1059 = sbr.rel (%p1057) target = $region104
      $region103: #{tpu_custom_call.1} parent=5 // pred_region
        %s1060 = ssub.s32 %s28, 2
        // Predicated region
        $region105: #{tpu_custom_call.1} parent=103 // pred_check
          %p1061 = pneg %p356
        $region106: #{tpu_custom_call.1} parent=103 // pred_check_branch
          %1063 = sbr.rel (%p1061) target = $region108
        $region107: #{tpu_custom_call.1} parent=103 // pred_region
          %s1064 = sand.u32 %s341, 1
          %s1065 = scalar_lea.sflag [#allocation6], %s1064
          %s1066 = sand.u32 %s341, 1
          %s1067 = smul.addr %s1066, 4
          %s1068 = scalar_lea.vmem [#allocation13], %s1067
          %1069 = dma.done %s1065, 64
        $region108: #{tpu_custom_call.1} parent=103 // pred_fallthru
          _
      $region104: #{tpu_custom_call.1} parent=5 // pred_fallthru
        _
    $region6: #{tpu_custom_call.1} parent=1 // loop_footer
      %s32 = sadd.s32 1, %s28
    $region7: #{tpu_custom_call.1} parent=1 // loop_footer_branch
      %27 = sbr.rel target = $region3
    $region8: #{tpu_custom_call.1} parent=1 // loop_exit
      _
    %1070 = vsyncpa [#allocation5], 1
    %s1071 = scalar_lea.sflag [#allocation5], 1
    %1072 = vsyncpa %s1071, 1
    %1073 = vsyncpa [#allocation8], 1
    %1074 = vsyncpa [#allocation11], 1
    %1075 = vsyncpa [#allocation6], 1
    %s1076 = scalar_lea.sflag [#allocation6], 1
    %1077 = vsyncpa %s1076, 1

</llo_original>
